<compile_context>
chip_gen: v6e
topology: v6e:2x2x1
jax: 0.10.0
libtpu: 0.0.40
codegen_flags: <defaults>
</compile_context>

<pallas_src>
import jax
import jax.numpy as jnp
from jax.experimental import pallas as pl
from jax.experimental.pallas import tpu as pltpu


def _make_kernel(kernel_sizes, output_channels, H, W):
    n = len(kernel_sizes)
    OC = output_channels
    LANES = OC * W  # lane-packed width: one W-wide lane block per output channel

    def kernel(*refs):
        # refs = [x, w_lane_0..w_lane_{n-1}, bias_all, fc_w, fc_b, out, feat_scratch]
        x_ref = refs[0]
        w_refs = refs[1:1 + n]
        bias_ref = refs[1 + n]
        fc_w_ref = refs[2 + n]
        fc_b_ref = refs[3 + n]
        out_ref = refs[4 + n]
        feat_ref = refs[5 + n]

        # Lane-pack the image ONCE: replicate the W columns OC times along lanes.
        x = x_ref[...]                                         # (B, H, W)
        x_t = jnp.concatenate([x] * OC, axis=-1)               # (B, H, OC*W)

        # Hoist the per-kj lane rolls (shared by all branches).  Roll left by kj
        # aligns input column (j + kj) to lane position j of every lane block.
        max_k = max(kernel_sizes)
        shifted = [x_t] + [jnp.roll(x_t, -kj, axis=2) for kj in range(1, max_k)]

        for i, K in enumerate(kernel_sizes):
            w_ref = w_refs[i]                                  # (K*K, OC*W) lane-replicated taps
            OH, OW = H - K + 1, W - K + 1

            # Loop interchange: taps outermost, ONE lane-packed accumulator live.
            acc = None
            for kj in range(K):
                sh = shifted[kj]                               # (B, H, OC*W)
                for ki in range(K):
                    win = sh[:, ki:ki + OH, :]                 # (B, OH, OC*W) sublane slice
                    w_tap = w_ref[ki * K + kj, :][None, None, :]
                    tap = win * w_tap                          # one vmul covers all OC channels
                    acc = tap if acc is None else acc + tap

            # Global max pool (AdaptiveMaxPool2d((1,1))).  Lanes j >= OW inside
            # each block hold wrapped garbage and are excluded by the slice.
            r = jnp.max(acc, axis=1)                           # (B, OC*W)
            for oc in range(OC):
                col = jnp.max(r[:, oc * W:oc * W + OW], axis=1, keepdims=True)  # (B, 1)
                c = i * OC + oc
                feat_ref[:, c:c + 1] = col                     # scratch assembly, no lane concat

        # Bias + ReLU after the pool (exact), then one batched FC matmul on the MXU.
        feat = jnp.maximum(feat_ref[...] + bias_ref[...], 0.0)            # (B, n*OC)
        out = jnp.dot(feat, fc_w_ref[...],
                      preferred_element_type=jnp.float32) + fc_b_ref[...]
        out_ref[...] = out.astype(out_ref.dtype)               # dropout == identity (eval)

    return kernel


def cnn_for_fonts_forward(xinp, conv_weights, conv_biases, fc_weight, fc_bias):
    """Pallas forward of CNNforFonts (eval mode), PyTorch parameter layouts.

    xinp:         (B, 1, H, W) float32.
    conv_weights: list of (OC, 1, K, K) Conv2d weights (PyTorch OIHW layout).
    conv_biases:  list of (OC,) Conv2d biases.
    fc_weight:    (num_features, n*OC) Linear weight (PyTorch layout).
    fc_bias:      (num_features,) Linear bias.
    Returns (B, num_features).
    """
    B, c_in, H, W = xinp.shape
    assert c_in == 1, "CNNforFonts expects single-channel (grayscale) input"
    OC = int(conv_weights[0].shape[0])
    n = len(conv_weights)
    F_out = int(fc_weight.shape[0])
    assert fc_weight.shape == (F_out, n * OC), fc_weight.shape
    kernel_sizes = tuple(int(w.shape[2]) for w in conv_weights)

    x_bhw = xinp[:, 0, :, :].astype(jnp.float32)               # (B, H, W)

    inputs = [x_bhw]
    in_specs = [pl.BlockSpec(memory_space=pltpu.MemorySpace.VMEM)]

    # Lane-replicated tap tables: w_lane[q, oc*W + j] = w[oc, 0, ki, kj], q = ki*K + kj.
    for w in conv_weights:
        K = int(w.shape[2])
        w_lane = jnp.repeat(w.reshape(OC, K * K).T, W, axis=1)  # (K*K, OC*W)
        inputs.append(w_lane.astype(jnp.float32))
        in_specs.append(pl.BlockSpec(memory_space=pltpu.MemorySpace.VMEM))

    bias_all = jnp.concatenate([b.reshape(OC) for b in conv_biases]).reshape(1, n * OC)
    fc_w = fc_weight.T.astype(jnp.float32)                      # (n*OC, F)
    inputs += [bias_all.astype(jnp.float32), fc_w,
               fc_bias.reshape(1, F_out).astype(jnp.float32)]
    in_specs += [pl.BlockSpec(memory_space=pltpu.MemorySpace.VMEM)] * 3

    # Advisory cost estimate (latency-bound call; lets XLA schedule around it).
    conv_flops = sum(2 * B * (H - K + 1) * (W - K + 1) * K * K * OC for K in kernel_sizes)
    fc_flops = 2 * B * (n * OC) * F_out
    bytes_accessed = sum(int(a.size) * 4 for a in inputs) + B * F_out * 4
    cost = pl.CostEstimate(flops=conv_flops + fc_flops, transcendentals=0,
                           bytes_accessed=bytes_accessed)

    # Single grid step: at B=2 the whole working set lives in VMEM for one
    # invocation, so there is no per-step pipeline overhead and weights DMA once.
    out = pl.pallas_call(
        _make_kernel(kernel_sizes, OC, H, W),
        out_shape=jax.ShapeDtypeStruct((B, F_out), jnp.float32),
        in_specs=in_specs,
        out_specs=pl.BlockSpec(memory_space=pltpu.MemorySpace.VMEM),
        scratch_shapes=[pltpu.VMEM((B, n * OC), jnp.float32)],
        cost_estimate=cost,
    )(*inputs)
    return out


def reference_forward(xinp, conv_weights, conv_biases, fc_weight, fc_bias):
    """Pure-JAX reference mirroring the PyTorch forward (eval mode)."""
    feats = []
    for w, b in zip(conv_weights, conv_biases):
        y = jax.lax.conv_general_dilated(
            xinp, w, window_strides=(1, 1), padding="VALID",
            dimension_numbers=("NCHW", "OIHW", "NCHW"))
        y = jax.nn.relu(y + b.reshape(1, -1, 1, 1))
        feats.append(jnp.max(y, axis=(2, 3)))                   # AdaptiveMaxPool2d((1,1)).squeeze()
    feat = jnp.concatenate(feats, axis=1)
    return feat @ fc_weight.T + fc_bias


if __name__ == "__main__":
    # Module config: CNNforFonts(cnn_type="basic", kernel_sizes=[3,5],
    #                            output_channels=8, num_features=32)
    kernel_sizes = (3, 5)
    output_channels = 8
    num_features = 32
    B, H, W = 2, 16, 16

    key = jax.random.PRNGKey(0)
    keys = jax.random.split(key, 2 * len(kernel_sizes) + 3)
    xinp = jax.random.normal(keys[0], (B, 1, H, W), jnp.float32)

    conv_weights, conv_biases = [], []
    for i, K in enumerate(kernel_sizes):
        conv_weights.append(
            0.1 * jax.random.normal(keys[1 + 2 * i], (output_channels, 1, K, K), jnp.float32))
        conv_biases.append(
            0.1 * jax.random.normal(keys[2 + 2 * i], (output_channels,), jnp.float32))
    fc_weight = 0.1 * jax.random.normal(
        keys[-2], (num_features, len(kernel_sizes) * output_channels), jnp.float32)
    fc_bias = 0.1 * jax.random.normal(keys[-1], (num_features,), jnp.float32)

    out = cnn_for_fonts_forward(xinp, conv_weights, conv_biases, fc_weight, fc_bias)
    out = jax.block_until_ready(out)

    ref = reference_forward(xinp, conv_weights, conv_biases, fc_weight, fc_bias)
    assert out.shape == (B, num_features), out.shape
    err = float(jnp.max(jnp.abs(out - ref)))
    assert jnp.allclose(out, ref, rtol=1e-4, atol=1e-4), ("mismatch vs reference", err)
    print("KERNEL_OK")
</pallas_src>

<mosaic_0001>
module attributes {stable_mosaic.version = 11 : i64} {
  func.func @kernel(%arg0: memref<2x16x16xf32, #tpu.memory_space<vmem>>, %arg1: memref<9x128xf32, #tpu.memory_space<vmem>>, %arg2: memref<25x128xf32, #tpu.memory_space<vmem>>, %arg3: memref<1x16xf32, #tpu.memory_space<vmem>>, %arg4: memref<16x32xf32, #tpu.memory_space<vmem>>, %arg5: memref<1x32xf32, #tpu.memory_space<vmem>>, %arg6: memref<2x32xf32, #tpu.memory_space<vmem>>, %arg7: memref<2x16xf32, #tpu.memory_space<vmem>>) attributes {dimension_semantics = [], scalar_prefetch = 0 : i64, scratch_operands = 1 : i64, tpu.core_type = #tpu.core_type<tc>} {
    %c0 = arith.constant 0 : index
    %c0_0 = arith.constant 0 : index
    %c0_1 = arith.constant 0 : index
    %0 = vector.load %arg0[%c0, %c0_0, %c0_1] : memref<2x16x16xf32, #tpu.memory_space<vmem>>, vector<2x16x16xf32>
    %1 = tpu.concatenate %0, %0, %0, %0, %0, %0, %0, %0 in 2 : vector<2x16x16xf32>, vector<2x16x16xf32>, vector<2x16x16xf32>, vector<2x16x16xf32>, vector<2x16x16xf32>, vector<2x16x16xf32>, vector<2x16x16xf32>, vector<2x16x16xf32> -> vector<2x16x128xf32>
    %2 = vector.extract_strided_slice %1 {offsets = [0, 0, 1], sizes = [2, 16, 127], strides = [1, 1, 1]} : vector<2x16x128xf32> to vector<2x16x127xf32>
    %3 = vector.extract_strided_slice %1 {offsets = [0, 0, 0], sizes = [2, 16, 1], strides = [1, 1, 1]} : vector<2x16x128xf32> to vector<2x16x1xf32>
    %4 = tpu.concatenate %2, %3 in 2 : vector<2x16x127xf32>, vector<2x16x1xf32> -> vector<2x16x128xf32>
    %5 = vector.extract_strided_slice %1 {offsets = [0, 0, 2], sizes = [2, 16, 126], strides = [1, 1, 1]} : vector<2x16x128xf32> to vector<2x16x126xf32>
    %6 = vector.extract_strided_slice %1 {offsets = [0, 0, 0], sizes = [2, 16, 2], strides = [1, 1, 1]} : vector<2x16x128xf32> to vector<2x16x2xf32>
    %7 = tpu.concatenate %5, %6 in 2 : vector<2x16x126xf32>, vector<2x16x2xf32> -> vector<2x16x128xf32>
    %8 = vector.extract_strided_slice %1 {offsets = [0, 0, 3], sizes = [2, 16, 125], strides = [1, 1, 1]} : vector<2x16x128xf32> to vector<2x16x125xf32>
    %9 = vector.extract_strided_slice %1 {offsets = [0, 0, 0], sizes = [2, 16, 3], strides = [1, 1, 1]} : vector<2x16x128xf32> to vector<2x16x3xf32>
    %10 = tpu.concatenate %8, %9 in 2 : vector<2x16x125xf32>, vector<2x16x3xf32> -> vector<2x16x128xf32>
    %11 = vector.extract_strided_slice %1 {offsets = [0, 0, 4], sizes = [2, 16, 124], strides = [1, 1, 1]} : vector<2x16x128xf32> to vector<2x16x124xf32>
    %12 = vector.extract_strided_slice %1 {offsets = [0, 0, 0], sizes = [2, 16, 4], strides = [1, 1, 1]} : vector<2x16x128xf32> to vector<2x16x4xf32>
    %13 = tpu.concatenate %11, %12 in 2 : vector<2x16x124xf32>, vector<2x16x4xf32> -> vector<2x16x128xf32>
    %14 = vector.extract_strided_slice %1 {offsets = [0, 0, 0], sizes = [2, 14, 128], strides = [1, 1, 1]} : vector<2x16x128xf32> to vector<2x14x128xf32>
    %c0_2 = arith.constant 0 : index
    %c0_3 = arith.constant 0 : index
    %15 = vector.load %arg1[%c0_2, %c0_3] : memref<9x128xf32, #tpu.memory_space<vmem>>, vector<1x128xf32>
    %16 = vector.shape_cast %15 : vector<1x128xf32> to vector<128xf32>
    %17 = vector.shape_cast %16 : vector<128xf32> to vector<1x1x128xf32>
    %18 = vector.broadcast %17 : vector<1x1x128xf32> to vector<2x14x128xf32>
    %19 = arith.mulf %14, %18 : vector<2x14x128xf32>
    %20 = vector.extract_strided_slice %1 {offsets = [0, 1, 0], sizes = [2, 14, 128], strides = [1, 1, 1]} : vector<2x16x128xf32> to vector<2x14x128xf32>
    %c3 = arith.constant 3 : index
    %c0_4 = arith.constant 0 : index
    %21 = vector.load %arg1[%c3, %c0_4] : memref<9x128xf32, #tpu.memory_space<vmem>>, vector<1x128xf32>
    %22 = vector.shape_cast %21 : vector<1x128xf32> to vector<128xf32>
    %23 = vector.shape_cast %22 : vector<128xf32> to vector<1x1x128xf32>
    %24 = vector.broadcast %23 : vector<1x1x128xf32> to vector<2x14x128xf32>
    %25 = arith.mulf %20, %24 : vector<2x14x128xf32>
    %26 = arith.addf %19, %25 : vector<2x14x128xf32>
    %27 = vector.extract_strided_slice %1 {offsets = [0, 2, 0], sizes = [2, 14, 128], strides = [1, 1, 1]} : vector<2x16x128xf32> to vector<2x14x128xf32>
    %c6 = arith.constant 6 : index
    %c0_5 = arith.constant 0 : index
    %28 = vector.load %arg1[%c6, %c0_5] : memref<9x128xf32, #tpu.memory_space<vmem>>, vector<1x128xf32>
    %29 = vector.shape_cast %28 : vector<1x128xf32> to vector<128xf32>
    %30 = vector.shape_cast %29 : vector<128xf32> to vector<1x1x128xf32>
    %31 = vector.broadcast %30 : vector<1x1x128xf32> to vector<2x14x128xf32>
    %32 = arith.mulf %27, %31 : vector<2x14x128xf32>
    %33 = arith.addf %26, %32 : vector<2x14x128xf32>
    %34 = vector.extract_strided_slice %4 {offsets = [0, 0, 0], sizes = [2, 14, 128], strides = [1, 1, 1]} : vector<2x16x128xf32> to vector<2x14x128xf32>
    %c1 = arith.constant 1 : index
    %c0_6 = arith.constant 0 : index
    %35 = vector.load %arg1[%c1, %c0_6] : memref<9x128xf32, #tpu.memory_space<vmem>>, vector<1x128xf32>
    %36 = vector.shape_cast %35 : vector<1x128xf32> to vector<128xf32>
    %37 = vector.shape_cast %36 : vector<128xf32> to vector<1x1x128xf32>
    %38 = vector.broadcast %37 : vector<1x1x128xf32> to vector<2x14x128xf32>
    %39 = arith.mulf %34, %38 : vector<2x14x128xf32>
    %40 = arith.addf %33, %39 : vector<2x14x128xf32>
    %41 = vector.extract_strided_slice %4 {offsets = [0, 1, 0], sizes = [2, 14, 128], strides = [1, 1, 1]} : vector<2x16x128xf32> to vector<2x14x128xf32>
    %c4 = arith.constant 4 : index
    %c0_7 = arith.constant 0 : index
    %42 = vector.load %arg1[%c4, %c0_7] : memref<9x128xf32, #tpu.memory_space<vmem>>, vector<1x128xf32>
    %43 = vector.shape_cast %42 : vector<1x128xf32> to vector<128xf32>
    %44 = vector.shape_cast %43 : vector<128xf32> to vector<1x1x128xf32>
    %45 = vector.broadcast %44 : vector<1x1x128xf32> to vector<2x14x128xf32>
    %46 = arith.mulf %41, %45 : vector<2x14x128xf32>
    %47 = arith.addf %40, %46 : vector<2x14x128xf32>
    %48 = vector.extract_strided_slice %4 {offsets = [0, 2, 0], sizes = [2, 14, 128], strides = [1, 1, 1]} : vector<2x16x128xf32> to vector<2x14x128xf32>
    %c7 = arith.constant 7 : index
    %c0_8 = arith.constant 0 : index
    %49 = vector.load %arg1[%c7, %c0_8] : memref<9x128xf32, #tpu.memory_space<vmem>>, vector<1x128xf32>
    %50 = vector.shape_cast %49 : vector<1x128xf32> to vector<128xf32>
    %51 = vector.shape_cast %50 : vector<128xf32> to vector<1x1x128xf32>
    %52 = vector.broadcast %51 : vector<1x1x128xf32> to vector<2x14x128xf32>
    %53 = arith.mulf %48, %52 : vector<2x14x128xf32>
    %54 = arith.addf %47, %53 : vector<2x14x128xf32>
    %55 = vector.extract_strided_slice %7 {offsets = [0, 0, 0], sizes = [2, 14, 128], strides = [1, 1, 1]} : vector<2x16x128xf32> to vector<2x14x128xf32>
    %c2 = arith.constant 2 : index
    %c0_9 = arith.constant 0 : index
    %56 = vector.load %arg1[%c2, %c0_9] : memref<9x128xf32, #tpu.memory_space<vmem>>, vector<1x128xf32>
    %57 = vector.shape_cast %56 : vector<1x128xf32> to vector<128xf32>
    %58 = vector.shape_cast %57 : vector<128xf32> to vector<1x1x128xf32>
    %59 = vector.broadcast %58 : vector<1x1x128xf32> to vector<2x14x128xf32>
    %60 = arith.mulf %55, %59 : vector<2x14x128xf32>
    %61 = arith.addf %54, %60 : vector<2x14x128xf32>
    %62 = vector.extract_strided_slice %7 {offsets = [0, 1, 0], sizes = [2, 14, 128], strides = [1, 1, 1]} : vector<2x16x128xf32> to vector<2x14x128xf32>
    %c5 = arith.constant 5 : index
    %c0_10 = arith.constant 0 : index
    %63 = vector.load %arg1[%c5, %c0_10] : memref<9x128xf32, #tpu.memory_space<vmem>>, vector<1x128xf32>
    %64 = vector.shape_cast %63 : vector<1x128xf32> to vector<128xf32>
    %65 = vector.shape_cast %64 : vector<128xf32> to vector<1x1x128xf32>
    %66 = vector.broadcast %65 : vector<1x1x128xf32> to vector<2x14x128xf32>
    %67 = arith.mulf %62, %66 : vector<2x14x128xf32>
    %68 = arith.addf %61, %67 : vector<2x14x128xf32>
    %69 = vector.extract_strided_slice %7 {offsets = [0, 2, 0], sizes = [2, 14, 128], strides = [1, 1, 1]} : vector<2x16x128xf32> to vector<2x14x128xf32>
    %c8 = arith.constant 8 : index
    %c0_11 = arith.constant 0 : index
    %70 = vector.load %arg1[%c8, %c0_11] : memref<9x128xf32, #tpu.memory_space<vmem>>, vector<1x128xf32>
    %71 = vector.shape_cast %70 : vector<1x128xf32> to vector<128xf32>
    %72 = vector.shape_cast %71 : vector<128xf32> to vector<1x1x128xf32>
    %73 = vector.broadcast %72 : vector<1x1x128xf32> to vector<2x14x128xf32>
    %74 = arith.mulf %69, %73 : vector<2x14x128xf32>
    %75 = arith.addf %68, %74 : vector<2x14x128xf32>
    %cst = arith.constant dense<0xFF800000> : vector<2x128xf32>
    %76 = vector.multi_reduction <maximumf>, %75, %cst [1] : vector<2x14x128xf32> to vector<2x128xf32>
    %77 = vector.extract_strided_slice %76 {offsets = [0, 0], sizes = [2, 14], strides = [1, 1]} : vector<2x128xf32> to vector<2x14xf32>
    %cst_12 = arith.constant dense<0xFF800000> : vector<2xf32>
    %78 = vector.multi_reduction <maximumf>, %77, %cst_12 [1] : vector<2x14xf32> to vector<2xf32>
    %79 = vector.shape_cast %78 : vector<2xf32> to vector<2x1xf32>
    %c0_13 = arith.constant 0 : index
    %c0_14 = arith.constant 0 : index
    %80 = vector.load %arg7[%c0_13, %c0_14] : memref<2x16xf32, #tpu.memory_space<vmem>>, vector<2x1xf32>
    tpu.vector_store %arg7[%c0_13, %c0_14], %79 {strides = array<i32>} : memref<2x16xf32, #tpu.memory_space<vmem>>, vector<2x1xf32>,
    %81 = vector.extract_strided_slice %76 {offsets = [0, 16], sizes = [2, 14], strides = [1, 1]} : vector<2x128xf32> to vector<2x14xf32>
    %cst_15 = arith.constant dense<0xFF800000> : vector<2xf32>
    %82 = vector.multi_reduction <maximumf>, %81, %cst_15 [1] : vector<2x14xf32> to vector<2xf32>
    %83 = vector.shape_cast %82 : vector<2xf32> to vector<2x1xf32>
    %c0_16 = arith.constant 0 : index
    %c1_17 = arith.constant 1 : index
    %84 = vector.load %arg7[%c0_16, %c1_17] : memref<2x16xf32, #tpu.memory_space<vmem>>, vector<2x1xf32>
    tpu.vector_store %arg7[%c0_16, %c1_17], %83 {strides = array<i32>} : memref<2x16xf32, #tpu.memory_space<vmem>>, vector<2x1xf32>,
    %85 = vector.extract_strided_slice %76 {offsets = [0, 32], sizes = [2, 14], strides = [1, 1]} : vector<2x128xf32> to vector<2x14xf32>
    %cst_18 = arith.constant dense<0xFF800000> : vector<2xf32>
    %86 = vector.multi_reduction <maximumf>, %85, %cst_18 [1] : vector<2x14xf32> to vector<2xf32>
    %87 = vector.shape_cast %86 : vector<2xf32> to vector<2x1xf32>
    %c0_19 = arith.constant 0 : index
    %c2_20 = arith.constant 2 : index
    %88 = vector.load %arg7[%c0_19, %c2_20] : memref<2x16xf32, #tpu.memory_space<vmem>>, vector<2x1xf32>
    tpu.vector_store %arg7[%c0_19, %c2_20], %87 {strides = array<i32>} : memref<2x16xf32, #tpu.memory_space<vmem>>, vector<2x1xf32>,
    %89 = vector.extract_strided_slice %76 {offsets = [0, 48], sizes = [2, 14], strides = [1, 1]} : vector<2x128xf32> to vector<2x14xf32>
    %cst_21 = arith.constant dense<0xFF800000> : vector<2xf32>
    %90 = vector.multi_reduction <maximumf>, %89, %cst_21 [1] : vector<2x14xf32> to vector<2xf32>
    %91 = vector.shape_cast %90 : vector<2xf32> to vector<2x1xf32>
    %c0_22 = arith.constant 0 : index
    %c3_23 = arith.constant 3 : index
    %92 = vector.load %arg7[%c0_22, %c3_23] : memref<2x16xf32, #tpu.memory_space<vmem>>, vector<2x1xf32>
    tpu.vector_store %arg7[%c0_22, %c3_23], %91 {strides = array<i32>} : memref<2x16xf32, #tpu.memory_space<vmem>>, vector<2x1xf32>,
    %93 = vector.extract_strided_slice %76 {offsets = [0, 64], sizes = [2, 14], strides = [1, 1]} : vector<2x128xf32> to vector<2x14xf32>
    %cst_24 = arith.constant dense<0xFF800000> : vector<2xf32>
    %94 = vector.multi_reduction <maximumf>, %93, %cst_24 [1] : vector<2x14xf32> to vector<2xf32>
    %95 = vector.shape_cast %94 : vector<2xf32> to vector<2x1xf32>
    %c0_25 = arith.constant 0 : index
    %c4_26 = arith.constant 4 : index
    %96 = vector.load %arg7[%c0_25, %c4_26] : memref<2x16xf32, #tpu.memory_space<vmem>>, vector<2x1xf32>
    tpu.vector_store %arg7[%c0_25, %c4_26], %95 {strides = array<i32>} : memref<2x16xf32, #tpu.memory_space<vmem>>, vector<2x1xf32>,
    %97 = vector.extract_strided_slice %76 {offsets = [0, 80], sizes = [2, 14], strides = [1, 1]} : vector<2x128xf32> to vector<2x14xf32>
    %cst_27 = arith.constant dense<0xFF800000> : vector<2xf32>
    %98 = vector.multi_reduction <maximumf>, %97, %cst_27 [1] : vector<2x14xf32> to vector<2xf32>
    %99 = vector.shape_cast %98 : vector<2xf32> to vector<2x1xf32>
    %c0_28 = arith.constant 0 : index
    %c5_29 = arith.constant 5 : index
    %100 = vector.load %arg7[%c0_28, %c5_29] : memref<2x16xf32, #tpu.memory_space<vmem>>, vector<2x1xf32>
    tpu.vector_store %arg7[%c0_28, %c5_29], %99 {strides = array<i32>} : memref<2x16xf32, #tpu.memory_space<vmem>>, vector<2x1xf32>,
    %101 = vector.extract_strided_slice %76 {offsets = [0, 96], sizes = [2, 14], strides = [1, 1]} : vector<2x128xf32> to vector<2x14xf32>
    %cst_30 = arith.constant dense<0xFF800000> : vector<2xf32>
    %102 = vector.multi_reduction <maximumf>, %101, %cst_30 [1] : vector<2x14xf32> to vector<2xf32>
    %103 = vector.shape_cast %102 : vector<2xf32> to vector<2x1xf32>
    %c0_31 = arith.constant 0 : index
    %c6_32 = arith.constant 6 : index
    %104 = vector.load %arg7[%c0_31, %c6_32] : memref<2x16xf32, #tpu.memory_space<vmem>>, vector<2x1xf32>
    tpu.vector_store %arg7[%c0_31, %c6_32], %103 {strides = array<i32>} : memref<2x16xf32, #tpu.memory_space<vmem>>, vector<2x1xf32>,
    %105 = vector.extract_strided_slice %76 {offsets = [0, 112], sizes = [2, 14], strides = [1, 1]} : vector<2x128xf32> to vector<2x14xf32>
    %cst_33 = arith.constant dense<0xFF800000> : vector<2xf32>
    %106 = vector.multi_reduction <maximumf>, %105, %cst_33 [1] : vector<2x14xf32> to vector<2xf32>
    %107 = vector.shape_cast %106 : vector<2xf32> to vector<2x1xf32>
    %c0_34 = arith.constant 0 : index
    %c7_35 = arith.constant 7 : index
    %108 = vector.load %arg7[%c0_34, %c7_35] : memref<2x16xf32, #tpu.memory_space<vmem>>, vector<2x1xf32>
    tpu.vector_store %arg7[%c0_34, %c7_35], %107 {strides = array<i32>} : memref<2x16xf32, #tpu.memory_space<vmem>>, vector<2x1xf32>,
    %109 = vector.extract_strided_slice %1 {offsets = [0, 0, 0], sizes = [2, 12, 128], strides = [1, 1, 1]} : vector<2x16x128xf32> to vector<2x12x128xf32>
    %c0_36 = arith.constant 0 : index
    %c0_37 = arith.constant 0 : index
    %110 = vector.load %arg2[%c0_36, %c0_37] : memref<25x128xf32, #tpu.memory_space<vmem>>, vector<1x128xf32>
    %111 = vector.shape_cast %110 : vector<1x128xf32> to vector<128xf32>
    %112 = vector.shape_cast %111 : vector<128xf32> to vector<1x1x128xf32>
    %113 = vector.broadcast %112 : vector<1x1x128xf32> to vector<2x12x128xf32>
    %114 = arith.mulf %109, %113 : vector<2x12x128xf32>
    %115 = vector.extract_strided_slice %1 {offsets = [0, 1, 0], sizes = [2, 12, 128], strides = [1, 1, 1]} : vector<2x16x128xf32> to vector<2x12x128xf32>
    %c5_38 = arith.constant 5 : index
    %c0_39 = arith.constant 0 : index
    %116 = vector.load %arg2[%c5_38, %c0_39] : memref<25x128xf32, #tpu.memory_space<vmem>>, vector<1x128xf32>
    %117 = vector.shape_cast %116 : vector<1x128xf32> to vector<128xf32>
    %118 = vector.shape_cast %117 : vector<128xf32> to vector<1x1x128xf32>
    %119 = vector.broadcast %118 : vector<1x1x128xf32> to vector<2x12x128xf32>
    %120 = arith.mulf %115, %119 : vector<2x12x128xf32>
    %121 = arith.addf %114, %120 : vector<2x12x128xf32>
    %122 = vector.extract_strided_slice %1 {offsets = [0, 2, 0], sizes = [2, 12, 128], strides = [1, 1, 1]} : vector<2x16x128xf32> to vector<2x12x128xf32>
    %c10 = arith.constant 10 : index
    %c0_40 = arith.constant 0 : index
    %123 = vector.load %arg2[%c10, %c0_40] : memref<25x128xf32, #tpu.memory_space<vmem>>, vector<1x128xf32>
    %124 = vector.shape_cast %123 : vector<1x128xf32> to vector<128xf32>
    %125 = vector.shape_cast %124 : vector<128xf32> to vector<1x1x128xf32>
    %126 = vector.broadcast %125 : vector<1x1x128xf32> to vector<2x12x128xf32>
    %127 = arith.mulf %122, %126 : vector<2x12x128xf32>
    %128 = arith.addf %121, %127 : vector<2x12x128xf32>
    %129 = vector.extract_strided_slice %1 {offsets = [0, 3, 0], sizes = [2, 12, 128], strides = [1, 1, 1]} : vector<2x16x128xf32> to vector<2x12x128xf32>
    %c15 = arith.constant 15 : index
    %c0_41 = arith.constant 0 : index
    %130 = vector.load %arg2[%c15, %c0_41] : memref<25x128xf32, #tpu.memory_space<vmem>>, vector<1x128xf32>
    %131 = vector.shape_cast %130 : vector<1x128xf32> to vector<128xf32>
    %132 = vector.shape_cast %131 : vector<128xf32> to vector<1x1x128xf32>
    %133 = vector.broadcast %132 : vector<1x1x128xf32> to vector<2x12x128xf32>
    %134 = arith.mulf %129, %133 : vector<2x12x128xf32>
    %135 = arith.addf %128, %134 : vector<2x12x128xf32>
    %136 = vector.extract_strided_slice %1 {offsets = [0, 4, 0], sizes = [2, 12, 128], strides = [1, 1, 1]} : vector<2x16x128xf32> to vector<2x12x128xf32>
    %c20 = arith.constant 20 : index
    %c0_42 = arith.constant 0 : index
    %137 = vector.load %arg2[%c20, %c0_42] : memref<25x128xf32, #tpu.memory_space<vmem>>, vector<1x128xf32>
    %138 = vector.shape_cast %137 : vector<1x128xf32> to vector<128xf32>
    %139 = vector.shape_cast %138 : vector<128xf32> to vector<1x1x128xf32>
    %140 = vector.broadcast %139 : vector<1x1x128xf32> to vector<2x12x128xf32>
    %141 = arith.mulf %136, %140 : vector<2x12x128xf32>
    %142 = arith.addf %135, %141 : vector<2x12x128xf32>
    %143 = vector.extract_strided_slice %4 {offsets = [0, 0, 0], sizes = [2, 12, 128], strides = [1, 1, 1]} : vector<2x16x128xf32> to vector<2x12x128xf32>
    %c1_43 = arith.constant 1 : index
    %c0_44 = arith.constant 0 : index
    %144 = vector.load %arg2[%c1_43, %c0_44] : memref<25x128xf32, #tpu.memory_space<vmem>>, vector<1x128xf32>
    %145 = vector.shape_cast %144 : vector<1x128xf32> to vector<128xf32>
    %146 = vector.shape_cast %145 : vector<128xf32> to vector<1x1x128xf32>
    %147 = vector.broadcast %146 : vector<1x1x128xf32> to vector<2x12x128xf32>
    %148 = arith.mulf %143, %147 : vector<2x12x128xf32>
    %149 = arith.addf %142, %148 : vector<2x12x128xf32>
    %150 = vector.extract_strided_slice %4 {offsets = [0, 1, 0], sizes = [2, 12, 128], strides = [1, 1, 1]} : vector<2x16x128xf32> to vector<2x12x128xf32>
    %c6_45 = arith.constant 6 : index
    %c0_46 = arith.constant 0 : index
    %151 = vector.load %arg2[%c6_45, %c0_46] : memref<25x128xf32, #tpu.memory_space<vmem>>, vector<1x128xf32>
    %152 = vector.shape_cast %151 : vector<1x128xf32> to vector<128xf32>
    %153 = vector.shape_cast %152 : vector<128xf32> to vector<1x1x128xf32>
    %154 = vector.broadcast %153 : vector<1x1x128xf32> to vector<2x12x128xf32>
    %155 = arith.mulf %150, %154 : vector<2x12x128xf32>
    %156 = arith.addf %149, %155 : vector<2x12x128xf32>
    %157 = vector.extract_strided_slice %4 {offsets = [0, 2, 0], sizes = [2, 12, 128], strides = [1, 1, 1]} : vector<2x16x128xf32> to vector<2x12x128xf32>
    %c11 = arith.constant 11 : index
    %c0_47 = arith.constant 0 : index
    %158 = vector.load %arg2[%c11, %c0_47] : memref<25x128xf32, #tpu.memory_space<vmem>>, vector<1x128xf32>
    %159 = vector.shape_cast %158 : vector<1x128xf32> to vector<128xf32>
    %160 = vector.shape_cast %159 : vector<128xf32> to vector<1x1x128xf32>
    %161 = vector.broadcast %160 : vector<1x1x128xf32> to vector<2x12x128xf32>
    %162 = arith.mulf %157, %161 : vector<2x12x128xf32>
    %163 = arith.addf %156, %162 : vector<2x12x128xf32>
    %164 = vector.extract_strided_slice %4 {offsets = [0, 3, 0], sizes = [2, 12, 128], strides = [1, 1, 1]} : vector<2x16x128xf32> to vector<2x12x128xf32>
    %c16 = arith.constant 16 : index
    %c0_48 = arith.constant 0 : index
    %165 = vector.load %arg2[%c16, %c0_48] : memref<25x128xf32, #tpu.memory_space<vmem>>, vector<1x128xf32>
    %166 = vector.shape_cast %165 : vector<1x128xf32> to vector<128xf32>
    %167 = vector.shape_cast %166 : vector<128xf32> to vector<1x1x128xf32>
    %168 = vector.broadcast %167 : vector<1x1x128xf32> to vector<2x12x128xf32>
    %169 = arith.mulf %164, %168 : vector<2x12x128xf32>
    %170 = arith.addf %163, %169 : vector<2x12x128xf32>
    %171 = vector.extract_strided_slice %4 {offsets = [0, 4, 0], sizes = [2, 12, 128], strides = [1, 1, 1]} : vector<2x16x128xf32> to vector<2x12x128xf32>
    %c21 = arith.constant 21 : index
    %c0_49 = arith.constant 0 : index
    %172 = vector.load %arg2[%c21, %c0_49] : memref<25x128xf32, #tpu.memory_space<vmem>>, vector<1x128xf32>
    %173 = vector.shape_cast %172 : vector<1x128xf32> to vector<128xf32>
    %174 = vector.shape_cast %173 : vector<128xf32> to vector<1x1x128xf32>
    %175 = vector.broadcast %174 : vector<1x1x128xf32> to vector<2x12x128xf32>
    %176 = arith.mulf %171, %175 : vector<2x12x128xf32>
    %177 = arith.addf %170, %176 : vector<2x12x128xf32>
    %178 = vector.extract_strided_slice %7 {offsets = [0, 0, 0], sizes = [2, 12, 128], strides = [1, 1, 1]} : vector<2x16x128xf32> to vector<2x12x128xf32>
    %c2_50 = arith.constant 2 : index
    %c0_51 = arith.constant 0 : index
    %179 = vector.load %arg2[%c2_50, %c0_51] : memref<25x128xf32, #tpu.memory_space<vmem>>, vector<1x128xf32>
    %180 = vector.shape_cast %179 : vector<1x128xf32> to vector<128xf32>
    %181 = vector.shape_cast %180 : vector<128xf32> to vector<1x1x128xf32>
    %182 = vector.broadcast %181 : vector<1x1x128xf32> to vector<2x12x128xf32>
    %183 = arith.mulf %178, %182 : vector<2x12x128xf32>
    %184 = arith.addf %177, %183 : vector<2x12x128xf32>
    %185 = vector.extract_strided_slice %7 {offsets = [0, 1, 0], sizes = [2, 12, 128], strides = [1, 1, 1]} : vector<2x16x128xf32> to vector<2x12x128xf32>
    %c7_52 = arith.constant 7 : index
    %c0_53 = arith.constant 0 : index
    %186 = vector.load %arg2[%c7_52, %c0_53] : memref<25x128xf32, #tpu.memory_space<vmem>>, vector<1x128xf32>
    %187 = vector.shape_cast %186 : vector<1x128xf32> to vector<128xf32>
    %188 = vector.shape_cast %187 : vector<128xf32> to vector<1x1x128xf32>
    %189 = vector.broadcast %188 : vector<1x1x128xf32> to vector<2x12x128xf32>
    %190 = arith.mulf %185, %189 : vector<2x12x128xf32>
    %191 = arith.addf %184, %190 : vector<2x12x128xf32>
    %192 = vector.extract_strided_slice %7 {offsets = [0, 2, 0], sizes = [2, 12, 128], strides = [1, 1, 1]} : vector<2x16x128xf32> to vector<2x12x128xf32>
    %c12 = arith.constant 12 : index
    %c0_54 = arith.constant 0 : index
    %193 = vector.load %arg2[%c12, %c0_54] : memref<25x128xf32, #tpu.memory_space<vmem>>, vector<1x128xf32>
    %194 = vector.shape_cast %193 : vector<1x128xf32> to vector<128xf32>
    %195 = vector.shape_cast %194 : vector<128xf32> to vector<1x1x128xf32>
    %196 = vector.broadcast %195 : vector<1x1x128xf32> to vector<2x12x128xf32>
    %197 = arith.mulf %192, %196 : vector<2x12x128xf32>
    %198 = arith.addf %191, %197 : vector<2x12x128xf32>
    %199 = vector.extract_strided_slice %7 {offsets = [0, 3, 0], sizes = [2, 12, 128], strides = [1, 1, 1]} : vector<2x16x128xf32> to vector<2x12x128xf32>
    %c17 = arith.constant 17 : index
    %c0_55 = arith.constant 0 : index
    %200 = vector.load %arg2[%c17, %c0_55] : memref<25x128xf32, #tpu.memory_space<vmem>>, vector<1x128xf32>
    %201 = vector.shape_cast %200 : vector<1x128xf32> to vector<128xf32>
    %202 = vector.shape_cast %201 : vector<128xf32> to vector<1x1x128xf32>
    %203 = vector.broadcast %202 : vector<1x1x128xf32> to vector<2x12x128xf32>
    %204 = arith.mulf %199, %203 : vector<2x12x128xf32>
    %205 = arith.addf %198, %204 : vector<2x12x128xf32>
    %206 = vector.extract_strided_slice %7 {offsets = [0, 4, 0], sizes = [2, 12, 128], strides = [1, 1, 1]} : vector<2x16x128xf32> to vector<2x12x128xf32>
    %c22 = arith.constant 22 : index
    %c0_56 = arith.constant 0 : index
    %207 = vector.load %arg2[%c22, %c0_56] : memref<25x128xf32, #tpu.memory_space<vmem>>, vector<1x128xf32>
    %208 = vector.shape_cast %207 : vector<1x128xf32> to vector<128xf32>
    %209 = vector.shape_cast %208 : vector<128xf32> to vector<1x1x128xf32>
    %210 = vector.broadcast %209 : vector<1x1x128xf32> to vector<2x12x128xf32>
    %211 = arith.mulf %206, %210 : vector<2x12x128xf32>
    %212 = arith.addf %205, %211 : vector<2x12x128xf32>
    %213 = vector.extract_strided_slice %10 {offsets = [0, 0, 0], sizes = [2, 12, 128], strides = [1, 1, 1]} : vector<2x16x128xf32> to vector<2x12x128xf32>
    %c3_57 = arith.constant 3 : index
    %c0_58 = arith.constant 0 : index
    %214 = vector.load %arg2[%c3_57, %c0_58] : memref<25x128xf32, #tpu.memory_space<vmem>>, vector<1x128xf32>
    %215 = vector.shape_cast %214 : vector<1x128xf32> to vector<128xf32>
    %216 = vector.shape_cast %215 : vector<128xf32> to vector<1x1x128xf32>
    %217 = vector.broadcast %216 : vector<1x1x128xf32> to vector<2x12x128xf32>
    %218 = arith.mulf %213, %217 : vector<2x12x128xf32>
    %219 = arith.addf %212, %218 : vector<2x12x128xf32>
    %220 = vector.extract_strided_slice %10 {offsets = [0, 1, 0], sizes = [2, 12, 128], strides = [1, 1, 1]} : vector<2x16x128xf32> to vector<2x12x128xf32>
    %c8_59 = arith.constant 8 : index
    %c0_60 = arith.constant 0 : index
    %221 = vector.load %arg2[%c8_59, %c0_60] : memref<25x128xf32, #tpu.memory_space<vmem>>, vector<1x128xf32>
    %222 = vector.shape_cast %221 : vector<1x128xf32> to vector<128xf32>
    %223 = vector.shape_cast %222 : vector<128xf32> to vector<1x1x128xf32>
    %224 = vector.broadcast %223 : vector<1x1x128xf32> to vector<2x12x128xf32>
    %225 = arith.mulf %220, %224 : vector<2x12x128xf32>
    %226 = arith.addf %219, %225 : vector<2x12x128xf32>
    %227 = vector.extract_strided_slice %10 {offsets = [0, 2, 0], sizes = [2, 12, 128], strides = [1, 1, 1]} : vector<2x16x128xf32> to vector<2x12x128xf32>
    %c13 = arith.constant 13 : index
    %c0_61 = arith.constant 0 : index
    %228 = vector.load %arg2[%c13, %c0_61] : memref<25x128xf32, #tpu.memory_space<vmem>>, vector<1x128xf32>
    %229 = vector.shape_cast %228 : vector<1x128xf32> to vector<128xf32>
    %230 = vector.shape_cast %229 : vector<128xf32> to vector<1x1x128xf32>
    %231 = vector.broadcast %230 : vector<1x1x128xf32> to vector<2x12x128xf32>
    %232 = arith.mulf %227, %231 : vector<2x12x128xf32>
    %233 = arith.addf %226, %232 : vector<2x12x128xf32>
    %234 = vector.extract_strided_slice %10 {offsets = [0, 3, 0], sizes = [2, 12, 128], strides = [1, 1, 1]} : vector<2x16x128xf32> to vector<2x12x128xf32>
    %c18 = arith.constant 18 : index
    %c0_62 = arith.constant 0 : index
    %235 = vector.load %arg2[%c18, %c0_62] : memref<25x128xf32, #tpu.memory_space<vmem>>, vector<1x128xf32>
    %236 = vector.shape_cast %235 : vector<1x128xf32> to vector<128xf32>
    %237 = vector.shape_cast %236 : vector<128xf32> to vector<1x1x128xf32>
    %238 = vector.broadcast %237 : vector<1x1x128xf32> to vector<2x12x128xf32>
    %239 = arith.mulf %234, %238 : vector<2x12x128xf32>
    %240 = arith.addf %233, %239 : vector<2x12x128xf32>
    %241 = vector.extract_strided_slice %10 {offsets = [0, 4, 0], sizes = [2, 12, 128], strides = [1, 1, 1]} : vector<2x16x128xf32> to vector<2x12x128xf32>
    %c23 = arith.constant 23 : index
    %c0_63 = arith.constant 0 : index
    %242 = vector.load %arg2[%c23, %c0_63] : memref<25x128xf32, #tpu.memory_space<vmem>>, vector<1x128xf32>
    %243 = vector.shape_cast %242 : vector<1x128xf32> to vector<128xf32>
    %244 = vector.shape_cast %243 : vector<128xf32> to vector<1x1x128xf32>
    %245 = vector.broadcast %244 : vector<1x1x128xf32> to vector<2x12x128xf32>
    %246 = arith.mulf %241, %245 : vector<2x12x128xf32>
    %247 = arith.addf %240, %246 : vector<2x12x128xf32>
    %248 = vector.extract_strided_slice %13 {offsets = [0, 0, 0], sizes = [2, 12, 128], strides = [1, 1, 1]} : vector<2x16x128xf32> to vector<2x12x128xf32>
    %c4_64 = arith.constant 4 : index
    %c0_65 = arith.constant 0 : index
    %249 = vector.load %arg2[%c4_64, %c0_65] : memref<25x128xf32, #tpu.memory_space<vmem>>, vector<1x128xf32>
    %250 = vector.shape_cast %249 : vector<1x128xf32> to vector<128xf32>
    %251 = vector.shape_cast %250 : vector<128xf32> to vector<1x1x128xf32>
    %252 = vector.broadcast %251 : vector<1x1x128xf32> to vector<2x12x128xf32>
    %253 = arith.mulf %248, %252 : vector<2x12x128xf32>
    %254 = arith.addf %247, %253 : vector<2x12x128xf32>
    %255 = vector.extract_strided_slice %13 {offsets = [0, 1, 0], sizes = [2, 12, 128], strides = [1, 1, 1]} : vector<2x16x128xf32> to vector<2x12x128xf32>
    %c9 = arith.constant 9 : index
    %c0_66 = arith.constant 0 : index
    %256 = vector.load %arg2[%c9, %c0_66] : memref<25x128xf32, #tpu.memory_space<vmem>>, vector<1x128xf32>
    %257 = vector.shape_cast %256 : vector<1x128xf32> to vector<128xf32>
    %258 = vector.shape_cast %257 : vector<128xf32> to vector<1x1x128xf32>
    %259 = vector.broadcast %258 : vector<1x1x128xf32> to vector<2x12x128xf32>
    %260 = arith.mulf %255, %259 : vector<2x12x128xf32>
    %261 = arith.addf %254, %260 : vector<2x12x128xf32>
    %262 = vector.extract_strided_slice %13 {offsets = [0, 2, 0], sizes = [2, 12, 128], strides = [1, 1, 1]} : vector<2x16x128xf32> to vector<2x12x128xf32>
    %c14 = arith.constant 14 : index
    %c0_67 = arith.constant 0 : index
    %263 = vector.load %arg2[%c14, %c0_67] : memref<25x128xf32, #tpu.memory_space<vmem>>, vector<1x128xf32>
    %264 = vector.shape_cast %263 : vector<1x128xf32> to vector<128xf32>
    %265 = vector.shape_cast %264 : vector<128xf32> to vector<1x1x128xf32>
    %266 = vector.broadcast %265 : vector<1x1x128xf32> to vector<2x12x128xf32>
    %267 = arith.mulf %262, %266 : vector<2x12x128xf32>
    %268 = arith.addf %261, %267 : vector<2x12x128xf32>
    %269 = vector.extract_strided_slice %13 {offsets = [0, 3, 0], sizes = [2, 12, 128], strides = [1, 1, 1]} : vector<2x16x128xf32> to vector<2x12x128xf32>
    %c19 = arith.constant 19 : index
    %c0_68 = arith.constant 0 : index
    %270 = vector.load %arg2[%c19, %c0_68] : memref<25x128xf32, #tpu.memory_space<vmem>>, vector<1x128xf32>
    %271 = vector.shape_cast %270 : vector<1x128xf32> to vector<128xf32>
    %272 = vector.shape_cast %271 : vector<128xf32> to vector<1x1x128xf32>
    %273 = vector.broadcast %272 : vector<1x1x128xf32> to vector<2x12x128xf32>
    %274 = arith.mulf %269, %273 : vector<2x12x128xf32>
    %275 = arith.addf %268, %274 : vector<2x12x128xf32>
    %276 = vector.extract_strided_slice %13 {offsets = [0, 4, 0], sizes = [2, 12, 128], strides = [1, 1, 1]} : vector<2x16x128xf32> to vector<2x12x128xf32>
    %c24 = arith.constant 24 : index
    %c0_69 = arith.constant 0 : index
    %277 = vector.load %arg2[%c24, %c0_69] : memref<25x128xf32, #tpu.memory_space<vmem>>, vector<1x128xf32>
    %278 = vector.shape_cast %277 : vector<1x128xf32> to vector<128xf32>
    %279 = vector.shape_cast %278 : vector<128xf32> to vector<1x1x128xf32>
    %280 = vector.broadcast %279 : vector<1x1x128xf32> to vector<2x12x128xf32>
    %281 = arith.mulf %276, %280 : vector<2x12x128xf32>
    %282 = arith.addf %275, %281 : vector<2x12x128xf32>
    %cst_70 = arith.constant dense<0xFF800000> : vector<2x128xf32>
    %283 = vector.multi_reduction <maximumf>, %282, %cst_70 [1] : vector<2x12x128xf32> to vector<2x128xf32>
    %284 = vector.extract_strided_slice %283 {offsets = [0, 0], sizes = [2, 12], strides = [1, 1]} : vector<2x128xf32> to vector<2x12xf32>
    %cst_71 = arith.constant dense<0xFF800000> : vector<2xf32>
    %285 = vector.multi_reduction <maximumf>, %284, %cst_71 [1] : vector<2x12xf32> to vector<2xf32>
    %286 = vector.shape_cast %285 : vector<2xf32> to vector<2x1xf32>
    %c0_72 = arith.constant 0 : index
    %c8_73 = arith.constant 8 : index
    %287 = vector.load %arg7[%c0_72, %c8_73] : memref<2x16xf32, #tpu.memory_space<vmem>>, vector<2x1xf32>
    tpu.vector_store %arg7[%c0_72, %c8_73], %286 {strides = array<i32>} : memref<2x16xf32, #tpu.memory_space<vmem>>, vector<2x1xf32>,
    %288 = vector.extract_strided_slice %283 {offsets = [0, 16], sizes = [2, 12], strides = [1, 1]} : vector<2x128xf32> to vector<2x12xf32>
    %cst_74 = arith.constant dense<0xFF800000> : vector<2xf32>
    %289 = vector.multi_reduction <maximumf>, %288, %cst_74 [1] : vector<2x12xf32> to vector<2xf32>
    %290 = vector.shape_cast %289 : vector<2xf32> to vector<2x1xf32>
    %c0_75 = arith.constant 0 : index
    %c9_76 = arith.constant 9 : index
    %291 = vector.load %arg7[%c0_75, %c9_76] : memref<2x16xf32, #tpu.memory_space<vmem>>, vector<2x1xf32>
    tpu.vector_store %arg7[%c0_75, %c9_76], %290 {strides = array<i32>} : memref<2x16xf32, #tpu.memory_space<vmem>>, vector<2x1xf32>,
    %292 = vector.extract_strided_slice %283 {offsets = [0, 32], sizes = [2, 12], strides = [1, 1]} : vector<2x128xf32> to vector<2x12xf32>
    %cst_77 = arith.constant dense<0xFF800000> : vector<2xf32>
    %293 = vector.multi_reduction <maximumf>, %292, %cst_77 [1] : vector<2x12xf32> to vector<2xf32>
    %294 = vector.shape_cast %293 : vector<2xf32> to vector<2x1xf32>
    %c0_78 = arith.constant 0 : index
    %c10_79 = arith.constant 10 : index
    %295 = vector.load %arg7[%c0_78, %c10_79] : memref<2x16xf32, #tpu.memory_space<vmem>>, vector<2x1xf32>
    tpu.vector_store %arg7[%c0_78, %c10_79], %294 {strides = array<i32>} : memref<2x16xf32, #tpu.memory_space<vmem>>, vector<2x1xf32>,
    %296 = vector.extract_strided_slice %283 {offsets = [0, 48], sizes = [2, 12], strides = [1, 1]} : vector<2x128xf32> to vector<2x12xf32>
    %cst_80 = arith.constant dense<0xFF800000> : vector<2xf32>
    %297 = vector.multi_reduction <maximumf>, %296, %cst_80 [1] : vector<2x12xf32> to vector<2xf32>
    %298 = vector.shape_cast %297 : vector<2xf32> to vector<2x1xf32>
    %c0_81 = arith.constant 0 : index
    %c11_82 = arith.constant 11 : index
    %299 = vector.load %arg7[%c0_81, %c11_82] : memref<2x16xf32, #tpu.memory_space<vmem>>, vector<2x1xf32>
    tpu.vector_store %arg7[%c0_81, %c11_82], %298 {strides = array<i32>} : memref<2x16xf32, #tpu.memory_space<vmem>>, vector<2x1xf32>,
    %300 = vector.extract_strided_slice %283 {offsets = [0, 64], sizes = [2, 12], strides = [1, 1]} : vector<2x128xf32> to vector<2x12xf32>
    %cst_83 = arith.constant dense<0xFF800000> : vector<2xf32>
    %301 = vector.multi_reduction <maximumf>, %300, %cst_83 [1] : vector<2x12xf32> to vector<2xf32>
    %302 = vector.shape_cast %301 : vector<2xf32> to vector<2x1xf32>
    %c0_84 = arith.constant 0 : index
    %c12_85 = arith.constant 12 : index
    %303 = vector.load %arg7[%c0_84, %c12_85] : memref<2x16xf32, #tpu.memory_space<vmem>>, vector<2x1xf32>
    tpu.vector_store %arg7[%c0_84, %c12_85], %302 {strides = array<i32>} : memref<2x16xf32, #tpu.memory_space<vmem>>, vector<2x1xf32>,
    %304 = vector.extract_strided_slice %283 {offsets = [0, 80], sizes = [2, 12], strides = [1, 1]} : vector<2x128xf32> to vector<2x12xf32>
    %cst_86 = arith.constant dense<0xFF800000> : vector<2xf32>
    %305 = vector.multi_reduction <maximumf>, %304, %cst_86 [1] : vector<2x12xf32> to vector<2xf32>
    %306 = vector.shape_cast %305 : vector<2xf32> to vector<2x1xf32>
    %c0_87 = arith.constant 0 : index
    %c13_88 = arith.constant 13 : index
    %307 = vector.load %arg7[%c0_87, %c13_88] : memref<2x16xf32, #tpu.memory_space<vmem>>, vector<2x1xf32>
    tpu.vector_store %arg7[%c0_87, %c13_88], %306 {strides = array<i32>} : memref<2x16xf32, #tpu.memory_space<vmem>>, vector<2x1xf32>,
    %308 = vector.extract_strided_slice %283 {offsets = [0, 96], sizes = [2, 12], strides = [1, 1]} : vector<2x128xf32> to vector<2x12xf32>
    %cst_89 = arith.constant dense<0xFF800000> : vector<2xf32>
    %309 = vector.multi_reduction <maximumf>, %308, %cst_89 [1] : vector<2x12xf32> to vector<2xf32>
    %310 = vector.shape_cast %309 : vector<2xf32> to vector<2x1xf32>
    %c0_90 = arith.constant 0 : index
    %c14_91 = arith.constant 14 : index
    %311 = vector.load %arg7[%c0_90, %c14_91] : memref<2x16xf32, #tpu.memory_space<vmem>>, vector<2x1xf32>
    tpu.vector_store %arg7[%c0_90, %c14_91], %310 {strides = array<i32>} : memref<2x16xf32, #tpu.memory_space<vmem>>, vector<2x1xf32>,
    %312 = vector.extract_strided_slice %283 {offsets = [0, 112], sizes = [2, 12], strides = [1, 1]} : vector<2x128xf32> to vector<2x12xf32>
    %cst_92 = arith.constant dense<0xFF800000> : vector<2xf32>
    %313 = vector.multi_reduction <maximumf>, %312, %cst_92 [1] : vector<2x12xf32> to vector<2xf32>
    %314 = vector.shape_cast %313 : vector<2xf32> to vector<2x1xf32>
    %c0_93 = arith.constant 0 : index
    %c15_94 = arith.constant 15 : index
    %315 = vector.load %arg7[%c0_93, %c15_94] : memref<2x16xf32, #tpu.memory_space<vmem>>, vector<2x1xf32>
    tpu.vector_store %arg7[%c0_93, %c15_94], %314 {strides = array<i32>} : memref<2x16xf32, #tpu.memory_space<vmem>>, vector<2x1xf32>,
    %c0_95 = arith.constant 0 : index
    %c0_96 = arith.constant 0 : index
    %316 = vector.load %arg7[%c0_95, %c0_96] : memref<2x16xf32, #tpu.memory_space<vmem>>, vector<2x16xf32>
    %c0_97 = arith.constant 0 : index
    %c0_98 = arith.constant 0 : index
    %317 = vector.load %arg3[%c0_97, %c0_98] : memref<1x16xf32, #tpu.memory_space<vmem>>, vector<1x16xf32>
    %318 = vector.broadcast %317 : vector<1x16xf32> to vector<2x16xf32>
    %319 = arith.addf %316, %318 : vector<2x16xf32>
    %cst_99 = arith.constant 0.000000e+00 : f32
    %320 = vector.broadcast %cst_99 : f32 to vector<2x16xf32>
    %321 = arith.maximumf %319, %320 : vector<2x16xf32>
    %c0_100 = arith.constant 0 : index
    %c0_101 = arith.constant 0 : index
    %322 = vector.load %arg4[%c0_100, %c0_101] : memref<16x32xf32, #tpu.memory_space<vmem>>, vector<16x32xf32>
    %cst_102 = arith.constant dense<0.000000e+00> : vector<2x32xf32>
    %323 = tpu.matmul %321, %322, %cst_102 {dimension_numbers = #tpu.dot_dimension_numbers<[1], [0], [0], [1], [0, 0, 1, 1], [], []>} : vector<2x16xf32>, vector<16x32xf32>, vector<2x32xf32> -> vector<2x32xf32>
    %c0_103 = arith.constant 0 : index
    %c0_104 = arith.constant 0 : index
    %324 = vector.load %arg5[%c0_103, %c0_104] : memref<1x32xf32, #tpu.memory_space<vmem>>, vector<1x32xf32>
    %325 = vector.broadcast %324 : vector<1x32xf32> to vector<2x32xf32>
    %326 = arith.addf %323, %325 : vector<2x32xf32>
    %c0_105 = arith.constant 0 : index
    %c0_106 = arith.constant 0 : index
    %327 = vector.load %arg6[%c0_105, %c0_106] : memref<2x32xf32, #tpu.memory_space<vmem>>, vector<2x32xf32>
    tpu.vector_store %arg6[%c0_105, %c0_106], %326 {strides = array<i32>} : memref<2x32xf32, #tpu.memory_space<vmem>>, vector<2x32xf32>,
    return
  }
}

</mosaic_0001>

<llo_original>
// kernel: tpu_custom_call.1
$region0: #{tpu_custom_call.1}
  #allocation0 [shape = 'u32[]', space=smem, size = 0x4, offset = 0x4, fixed_abs, tag = 'smem constant byte address 0x4 - core index']
  #allocation1 [shape = 'u32[144,128]{1,0:T(1,128)}', space=vmem, size = 0x12000, scoped, tag = 'internal scratch']
  #allocation2 [shape = 'f32[2,16]{1,0:T(2,128)}', space=vmem, size = 0x400, scoped, tag = 'scratch operand']
  %s0 = inlined_call_operand.hbm [shape: f32[2,16,16], index: 0, kind: input, shape index: {}]
  %s1 = inlined_call_operand.hbm [shape: f32[9,128], index: 1, kind: input, shape index: {}]
  %s2 = inlined_call_operand.hbm [shape: f32[25,128], index: 2, kind: input, shape index: {}]
  %s3 = inlined_call_operand.vmem [shape: f32[1,16], index: 3, kind: input, shape index: {}]
  %s4 = inlined_call_operand.hbm [shape: f32[16,32], index: 4, kind: input, shape index: {}]
  %s5 = inlined_call_operand.vmem [shape: f32[1,32], index: 5, kind: input, shape index: {}]
  %s6 = inlined_call_operand.hbm [shape: f32[2,32], index: 6, kind: output, shape index: {}]
  %s7 = sld [smem:[#allocation0]]
  $region50: #{tpu_custom_call.1} parent=0
    _
  %s9 = ssub.s32 1, %s7
  %s10 = scalar_select 0, %s9, %s7
  $region1: #{tpu_custom_call.1} parent=0
    #allocation3 [shape = 'u8[16384]{0}', space=vmem, size = 0x4000, scoped, tag = 'input window, operand 0, single buffered']
    #allocation4 [shape = 's32[1]{0}', space=sflag, size = 0x4, scoped, tag = 'scoped memory for tpu_custom_call.1']
    #allocation5 [shape = 's32[1]{0}', space=sflag, size = 0x4, scoped, tag = 'scoped memory for tpu_custom_call.1']
    #allocation6 [shape = 'u8[8192]{0}', space=vmem, size = 0x2000, scoped, tag = 'input window, operand 1, single buffered']
    #allocation7 [shape = 's32[1]{0}', space=sflag, size = 0x4, scoped, tag = 'scoped memory for tpu_custom_call.1']
    #allocation8 [shape = 'u8[16384]{0}', space=vmem, size = 0x4000, scoped, tag = 'input window, operand 2, single buffered']
    #allocation9 [shape = 'u8[8192]{0}', space=vmem, size = 0x2000, scoped, tag = 'input window, operand 4, single buffered']
    #allocation10 [shape = 's32[1]{0}', space=sflag, size = 0x4, scoped, tag = 'scoped memory for tpu_custom_call.1']
    #allocation11 [shape = 'u8[1024]{0}', space=vmem, size = 0x400, scoped, tag = 'output window, operand 0, single buffered']
    %11 = vsyncpa [#allocation4], 0
    %12 = vsyncpa [#allocation7], 0
    %13 = vsyncpa [#allocation10], 0
    %14 = vsyncpa [#allocation5], 0
    // Predicated region
    $region2: #{tpu_custom_call.1} parent=1 // pred_check
      _
    $region3: #{tpu_custom_call.1} parent=1 // pred_check_branch
      %16 = sbr.rel (0) target = $region5
    $region4: #{tpu_custom_call.1} parent=1 // pred_region
      %s18 = ssub.s32 512, 512
      %19 = vsyncadd [#allocation4], %s18
      %s20 = sshll.u32 [#allocation3], 4
      %s21 = int_to_ptr.vmem [resolvable:$true] %s20
      %26 = dma.hbm_to_vmem [thread:$0]  %s0, 512, %s21, [#allocation4], 128, 128, 8
    $region5: #{tpu_custom_call.1} parent=1 // pred_fallthru
      _
    // Predicated region
    $region6: #{tpu_custom_call.1} parent=1 // pred_check
      _
    $region7: #{tpu_custom_call.1} parent=1 // pred_check_branch
      %28 = sbr.rel (0) target = $region9
    $region8: #{tpu_custom_call.1} parent=1 // pred_region
      %s30 = ssub.s32 256, 256
      %31 = vsyncadd [#allocation7], %s30
      %s32 = sshll.u32 [#allocation6], 4
      %s33 = int_to_ptr.vmem [resolvable:$true] %s32
      %38 = dma.hbm_to_vmem [thread:$0]  %s1, 256, %s33, [#allocation7], 128, 128, 8
    $region9: #{tpu_custom_call.1} parent=1 // pred_fallthru
      _
    // Predicated region
    $region10: #{tpu_custom_call.1} parent=1 // pred_check
      _
    $region11: #{tpu_custom_call.1} parent=1 // pred_check_branch
      %40 = sbr.rel (0) target = $region13
    $region12: #{tpu_custom_call.1} parent=1 // pred_region
      %s42 = ssub.s32 512, 512
      %43 = vsyncadd [#allocation7], %s42
      %s44 = sshll.u32 [#allocation8], 4
      %s45 = int_to_ptr.vmem [resolvable:$true] %s44
      %50 = dma.hbm_to_vmem [thread:$0]  %s2, 512, %s45, [#allocation7], 128, 128, 8
    $region13: #{tpu_custom_call.1} parent=1 // pred_fallthru
      _
    // Predicated region
    $region14: #{tpu_custom_call.1} parent=1 // pred_check
      _
    $region15: #{tpu_custom_call.1} parent=1 // pred_check_branch
      %52 = sbr.rel (0) target = $region17
    $region16: #{tpu_custom_call.1} parent=1 // pred_region
      _
    $region17: #{tpu_custom_call.1} parent=1 // pred_fallthru
      _
    // Predicated region
    $region18: #{tpu_custom_call.1} parent=1 // pred_check
      _
    $region19: #{tpu_custom_call.1} parent=1 // pred_check_branch
      %54 = sbr.rel (0) target = $region21
    $region20: #{tpu_custom_call.1} parent=1 // pred_region
      %s56 = ssub.s32 256, 256
      %57 = vsyncadd [#allocation10], %s56
      %s58 = sshll.u32 [#allocation9], 4
      %s59 = int_to_ptr.vmem [resolvable:$true] %s58
      %64 = dma.hbm_to_vmem [thread:$0]  %s4, 256, %s59, [#allocation10], 128, 128, 8
    $region21: #{tpu_custom_call.1} parent=1 // pred_fallthru
      _
    // Predicated region
    $region22: #{tpu_custom_call.1} parent=1 // pred_check
      _
    $region23: #{tpu_custom_call.1} parent=1 // pred_check_branch
      %66 = sbr.rel (0) target = $region25
    $region24: #{tpu_custom_call.1} parent=1 // pred_region
      _
    $region25: #{tpu_custom_call.1} parent=1 // pred_fallthru
      _
    // Predicated region
    $region26: #{tpu_custom_call.1} parent=1 // pred_check
      _
    $region27: #{tpu_custom_call.1} parent=1 // pred_check_branch
      %68 = sbr.rel (0) target = $region29
    $region28: #{tpu_custom_call.1} parent=1 // pred_region
      %69 = dma.done [#allocation4], 512
    $region29: #{tpu_custom_call.1} parent=1 // pred_fallthru
      _
    // Predicated region
    $region30: #{tpu_custom_call.1} parent=1 // pred_check
      _
    $region31: #{tpu_custom_call.1} parent=1 // pred_check_branch
      %71 = sbr.rel (0) target = $region33
    $region32: #{tpu_custom_call.1} parent=1 // pred_region
      %72 = dma.done [#allocation7], 256
    $region33: #{tpu_custom_call.1} parent=1 // pred_fallthru
      _
    // Predicated region
    $region34: #{tpu_custom_call.1} parent=1 // pred_check
      _
    $region35: #{tpu_custom_call.1} parent=1 // pred_check_branch
      %74 = sbr.rel (0) target = $region37
    $region36: #{tpu_custom_call.1} parent=1 // pred_region
      %75 = dma.done [#allocation7], 512
    $region37: #{tpu_custom_call.1} parent=1 // pred_fallthru
      _
    // Predicated region
    $region38: #{tpu_custom_call.1} parent=1 // pred_check
      _
    $region39: #{tpu_custom_call.1} parent=1 // pred_check_branch
      %77 = sbr.rel (0) target = $region41
    $region40: #{tpu_custom_call.1} parent=1 // pred_region
      %78 = dma.done [#allocation10], 256
    $region41: #{tpu_custom_call.1} parent=1 // pred_fallthru
      _
    %v79 = vld [vmem:[#allocation3] sm:$0xff]
    %v80 = vld [vmem:[#allocation3 + $0x8] sm:$0xff]
    %v81 = vld [vmem:[#allocation3 + $0x10] sm:$0xff]
    %v82 = vld [vmem:[#allocation3 + $0x18] sm:$0xff]
    %87 = vrot.lane.b32.xlu0 %v79, 16
    %v88 = vpop.permute.xlu0 %87
    %89 = vrot.lane.b32.xlu0 %v80, 16
    %v90 = vpop.permute.xlu0 %89
    %91 = vrot.lane.b32.xlu0 %v81, 16
    %v92 = vpop.permute.xlu0 %91
    %93 = vrot.lane.b32.xlu0 %v82, 16
    %v94 = vpop.permute.xlu0 %93
    %99 = vrot.lane.b32.xlu0 %v79, 32
    %v100 = vpop.permute.xlu0 %99
    %101 = vrot.lane.b32.xlu0 %v80, 32
    %v102 = vpop.permute.xlu0 %101
    %103 = vrot.lane.b32.xlu0 %v81, 32
    %v104 = vpop.permute.xlu0 %103
    %105 = vrot.lane.b32.xlu0 %v82, 32
    %v106 = vpop.permute.xlu0 %105
    %111 = vrot.lane.b32.xlu0 %v79, 48
    %v112 = vpop.permute.xlu0 %111
    %113 = vrot.lane.b32.xlu0 %v80, 48
    %v114 = vpop.permute.xlu0 %113
    %115 = vrot.lane.b32.xlu0 %v81, 48
    %v116 = vpop.permute.xlu0 %115
    %117 = vrot.lane.b32.xlu0 %v82, 48
    %v118 = vpop.permute.xlu0 %117
    %123 = vrot.lane.b32.xlu0 %v79, 64
    %v124 = vpop.permute.xlu0 %123
    %125 = vrot.lane.b32.xlu0 %v80, 64
    %v126 = vpop.permute.xlu0 %125
    %127 = vrot.lane.b32.xlu0 %v81, 64
    %v128 = vpop.permute.xlu0 %127
    %129 = vrot.lane.b32.xlu0 %v82, 64
    %v130 = vpop.permute.xlu0 %129
    %135 = vrot.lane.b32.xlu0 %v79, 80
    %v136 = vpop.permute.xlu0 %135
    %137 = vrot.lane.b32.xlu0 %v80, 80
    %v138 = vpop.permute.xlu0 %137
    %139 = vrot.lane.b32.xlu0 %v81, 80
    %v140 = vpop.permute.xlu0 %139
    %141 = vrot.lane.b32.xlu0 %v82, 80
    %v142 = vpop.permute.xlu0 %141
    %147 = vrot.lane.b32.xlu0 %v79, 96
    %v148 = vpop.permute.xlu0 %147
    %149 = vrot.lane.b32.xlu0 %v80, 96
    %v150 = vpop.permute.xlu0 %149
    %151 = vrot.lane.b32.xlu0 %v81, 96
    %v152 = vpop.permute.xlu0 %151
    %153 = vrot.lane.b32.xlu0 %v82, 96
    %v154 = vpop.permute.xlu0 %153
    %159 = vrot.lane.b32.xlu0 %v79, 112
    %v160 = vpop.permute.xlu0 %159
    %161 = vrot.lane.b32.xlu0 %v80, 112
    %v162 = vpop.permute.xlu0 %161
    %163 = vrot.lane.b32.xlu0 %v81, 112
    %v164 = vpop.permute.xlu0 %163
    %165 = vrot.lane.b32.xlu0 %v82, 112
    %v166 = vpop.permute.xlu0 %165
    %vm171 = vcmask 130048
    %v172 = vsel %vm171, %v79, %v88
    %v173 = vsel %vm171, %v80, %v90
    %v174 = vsel %vm171, %v81, %v92
    %v175 = vsel %vm171, %v82, %v94
    %vm176 = vcmask 261120
    %v177 = vsel %vm176, %v172, %v100
    %v178 = vsel %vm176, %v173, %v102
    %v179 = vsel %vm176, %v174, %v104
    %v180 = vsel %vm176, %v175, %v106
    %vm181 = vcmask 392192
    %v182 = vsel %vm181, %v177, %v112
    %v183 = vsel %vm181, %v178, %v114
    %v184 = vsel %vm181, %v179, %v116
    %v185 = vsel %vm181, %v180, %v118
    %vm186 = vcmask 523264
    %v187 = vsel %vm186, %v182, %v124
    %v188 = vsel %vm186, %v183, %v126
    %v189 = vsel %vm186, %v184, %v128
    %v190 = vsel %vm186, %v185, %v130
    %vm191 = vcmask 654336
    %v192 = vsel %vm191, %v187, %v136
    %v193 = vsel %vm191, %v188, %v138
    %v194 = vsel %vm191, %v189, %v140
    %v195 = vsel %vm191, %v190, %v142
    %vm196 = vcmask 785408
    %v197 = vsel %vm196, %v192, %v148
    %v198 = vsel %vm196, %v193, %v150
    %v199 = vsel %vm196, %v194, %v152
    %v200 = vsel %vm196, %v195, %v154
    %vm201 = vcmask 916480
    %v202 = vsel %vm201, %v197, %v160
    %v203 = vsel %vm201, %v198, %v162
    %v204 = vsel %vm201, %v199, %v164
    %v205 = vsel %vm201, %v200, %v166
    %210 = vrot.lane.b32.xlu0 %v202, 127
    %v211 = vpop.permute.xlu0 %210
    %212 = vrot.lane.b32.xlu0 %v203, 127
    %v213 = vpop.permute.xlu0 %212
    %214 = vrot.lane.b32.xlu0 %v204, 127
    %v215 = vpop.permute.xlu0 %214
    %216 = vrot.lane.b32.xlu0 %v205, 127
    %v217 = vpop.permute.xlu0 %216
    %222 = vrot.lane.b32.xlu0 %v202, 126
    %v223 = vpop.permute.xlu0 %222
    %224 = vrot.lane.b32.xlu0 %v203, 126
    %v225 = vpop.permute.xlu0 %224
    %226 = vrot.lane.b32.xlu0 %v204, 126
    %v227 = vpop.permute.xlu0 %226
    %228 = vrot.lane.b32.xlu0 %v205, 126
    %v229 = vpop.permute.xlu0 %228
    %234 = vrot.lane.b32.xlu0 %v202, 125
    %v235 = vpop.permute.xlu0 %234
    %236 = vrot.lane.b32.xlu0 %v203, 125
    %v237 = vpop.permute.xlu0 %236
    %238 = vrot.lane.b32.xlu0 %v204, 125
    %v239 = vpop.permute.xlu0 %238
    %240 = vrot.lane.b32.xlu0 %v205, 125
    %v241 = vpop.permute.xlu0 %240
    %246 = vrot.lane.b32.xlu0 %v202, 124
    %v247 = vpop.permute.xlu0 %246
    %248 = vrot.lane.b32.xlu0 %v203, 124
    %v249 = vpop.permute.xlu0 %248
    %250 = vrot.lane.b32.xlu0 %v204, 124
    %v251 = vpop.permute.xlu0 %250
    %252 = vrot.lane.b32.xlu0 %v205, 124
    %v253 = vpop.permute.xlu0 %252
    %v258 = vld [vmem:[#allocation6] sm:$0x1]
    %v259 = vlaneseq
    %v260 = vshrl.u32 %v259, 7
    %v261 = vsub.s32 0, %v260
    %v262 = vrot.slane %v258, %v261
    %v263 = vmul.f32 %v202, %v262
    %v264 = vmul.f32 %v203, %v262
    %v265 = vmul.f32 %v204, %v262
    %v266 = vmul.f32 %v205, %v262
    %v267 = vld [vmem:[#allocation6 + $0x3] sm:$0x1]
    %v268 = vlaneseq
    %v269 = vshrl.u32 %v268, 7
    %v270 = vsub.s32 0, %v269
    %v271 = vrot.slane %v267, %v270
    %v272 = vmul.f32 %v202, %v271
    %v273 = vmul.f32 %v203, %v271
    %v274 = vmul.f32 %v204, %v271
    %v275 = vmul.f32 %v205, %v271
    %vm280 = vcmask 1046528
    %v281 = vrot.slane %v272, 1
    %v282 = vrot.slane %v273, 1
    %v283 = vsel %vm280, %v281, %v282
    %v284 = vrot.slane %v274, 1
    %v285 = vrot.slane %v275, 1
    %v286 = vsel %vm280, %v284, %v285
    %v291 = vadd.f32 %v263, %v283
    %v292 = vadd.f32 %v264, %v282
    %v293 = vadd.f32 %v265, %v286
    %v294 = vadd.f32 %v266, %v285
    %v295 = vld [vmem:[#allocation6 + $0x6] sm:$0x1]
    %v296 = vlaneseq
    %v297 = vshrl.u32 %v296, 7
    %v298 = vsub.s32 0, %v297
    %v299 = vrot.slane %v295, %v298
    %v300 = vmul.f32 %v202, %v299
    %v301 = vmul.f32 %v203, %v299
    %v302 = vmul.f32 %v204, %v299
    %v303 = vmul.f32 %v205, %v299
    %vm308 = vcmask 1045504
    %v309 = vrot.slane %v300, 2
    %v310 = vrot.slane %v301, 2
    %v311 = vsel %vm308, %v309, %v310
    %v312 = vrot.slane %v302, 2
    %v313 = vrot.slane %v303, 2
    %v314 = vsel %vm308, %v312, %v313
    %v319 = vadd.f32 %v291, %v311
    %v320 = vadd.f32 %v292, %v310
    %v321 = vadd.f32 %v293, %v314
    %v322 = vadd.f32 %v294, %v313
    %v323 = vld [vmem:[#allocation6 + $0x1] sm:$0x1]
    %v324 = vlaneseq
    %v325 = vshrl.u32 %v324, 7
    %v326 = vsub.s32 0, %v325
    %v327 = vrot.slane %v323, %v326
    %v328 = vmul.f32 %v211, %v327
    %v329 = vmul.f32 %v213, %v327
    %v330 = vmul.f32 %v215, %v327
    %v331 = vmul.f32 %v217, %v327
    %v332 = vadd.f32 %v319, %v328
    %v333 = vadd.f32 %v320, %v329
    %v334 = vadd.f32 %v321, %v330
    %v335 = vadd.f32 %v322, %v331
    %v336 = vld [vmem:[#allocation6 + $0x4] sm:$0x1]
    %v337 = vlaneseq
    %v338 = vshrl.u32 %v337, 7
    %v339 = vsub.s32 0, %v338
    %v340 = vrot.slane %v336, %v339
    %v341 = vmul.f32 %v211, %v340
    %v342 = vmul.f32 %v213, %v340
    %v343 = vmul.f32 %v215, %v340
    %v344 = vmul.f32 %v217, %v340
    %v349 = vrot.slane %v341, 1
    %v350 = vrot.slane %v342, 1
    %v351 = vsel %vm280, %v349, %v350
    %v352 = vrot.slane %v343, 1
    %v353 = vrot.slane %v344, 1
    %v354 = vsel %vm280, %v352, %v353
    %v359 = vadd.f32 %v332, %v351
    %v360 = vadd.f32 %v333, %v350
    %v361 = vadd.f32 %v334, %v354
    %v362 = vadd.f32 %v335, %v353
    %v363 = vld [vmem:[#allocation6 + $0x7] sm:$0x1]
    %v364 = vlaneseq
    %v365 = vshrl.u32 %v364, 7
    %v366 = vsub.s32 0, %v365
    %v367 = vrot.slane %v363, %v366
    %v368 = vmul.f32 %v211, %v367
    %v369 = vmul.f32 %v213, %v367
    %v370 = vmul.f32 %v215, %v367
    %v371 = vmul.f32 %v217, %v367
    %v376 = vrot.slane %v368, 2
    %v377 = vrot.slane %v369, 2
    %v378 = vsel %vm308, %v376, %v377
    %v379 = vrot.slane %v370, 2
    %v380 = vrot.slane %v371, 2
    %v381 = vsel %vm308, %v379, %v380
    %v386 = vadd.f32 %v359, %v378
    %v387 = vadd.f32 %v360, %v377
    %v388 = vadd.f32 %v361, %v381
    %v389 = vadd.f32 %v362, %v380
    %v390 = vld [vmem:[#allocation6 + $0x2] sm:$0x1]
    %v391 = vlaneseq
    %v392 = vshrl.u32 %v391, 7
    %v393 = vsub.s32 0, %v392
    %v394 = vrot.slane %v390, %v393
    %v395 = vmul.f32 %v223, %v394
    %v396 = vmul.f32 %v225, %v394
    %v397 = vmul.f32 %v227, %v394
    %v398 = vmul.f32 %v229, %v394
    %v399 = vadd.f32 %v386, %v395
    %v400 = vadd.f32 %v387, %v396
    %v401 = vadd.f32 %v388, %v397
    %v402 = vadd.f32 %v389, %v398
    %v403 = vld [vmem:[#allocation6 + $0x5] sm:$0x1]
    %v404 = vlaneseq
    %v405 = vshrl.u32 %v404, 7
    %v406 = vsub.s32 0, %v405
    %v407 = vrot.slane %v403, %v406
    %v408 = vmul.f32 %v223, %v407
    %v409 = vmul.f32 %v225, %v407
    %v410 = vmul.f32 %v227, %v407
    %v411 = vmul.f32 %v229, %v407
    %v416 = vrot.slane %v408, 1
    %v417 = vrot.slane %v409, 1
    %v418 = vsel %vm280, %v416, %v417
    %v419 = vrot.slane %v410, 1
    %v420 = vrot.slane %v411, 1
    %v421 = vsel %vm280, %v419, %v420
    %v426 = vadd.f32 %v399, %v418
    %v427 = vadd.f32 %v400, %v417
    %v428 = vadd.f32 %v401, %v421
    %v429 = vadd.f32 %v402, %v420
    %v430 = vld [vmem:[#allocation6 + $0x8] sm:$0x1]
    %v431 = vlaneseq
    %v432 = vshrl.u32 %v431, 7
    %v433 = vsub.s32 0, %v432
    %v434 = vrot.slane %v430, %v433
    %v435 = vmul.f32 %v223, %v434
    %v436 = vmul.f32 %v225, %v434
    %v437 = vmul.f32 %v227, %v434
    %v438 = vmul.f32 %v229, %v434
    %v443 = vrot.slane %v435, 2
    %v444 = vrot.slane %v436, 2
    %v445 = vsel %vm308, %v443, %v444
    %v446 = vrot.slane %v437, 2
    %v447 = vrot.slane %v438, 2
    %v448 = vsel %vm308, %v446, %v447
    %v453 = vadd.f32 %v426, %v445
    %v454 = vadd.f32 %v427, %v444
    %v455 = vadd.f32 %v428, %v448
    %v456 = vadd.f32 %v429, %v447
    %v457 = vsel %vm308, %v454, -inf
    %v458 = vmax.f32 %v453, %v457
    %v459 = vrot.slane %v458, 4
    %v460 = vmax.f32 %v458, %v459
    %v461 = vrot.slane %v460, 2
    %v462 = vmax.f32 %v460, %v461
    %v463 = vrot.slane %v462, 1
    %v464 = vmax.f32 %v462, %v463
    %v465 = vsel %vm308, %v456, -inf
    %v466 = vmax.f32 %v455, %v465
    %v467 = vrot.slane %v466, 4
    %v468 = vmax.f32 %v466, %v467
    %v469 = vrot.slane %v468, 2
    %v470 = vmax.f32 %v468, %v469
    %v471 = vrot.slane %v470, 1
    %v472 = vmax.f32 %v470, %v471
    %vm475 = vcmask 1041409
    %v476 = vsel %vm475, %v472, %v464
    %vm478 = vcmask 107520
    %v479 = vsel %vm478, %v476, -inf
    %480 = vmax.xlane.f32.xlu0 %v479
    %v481 = vpop.xlane.xlu0 %480
    %vm482 = vcmask 1024
    %483 = vst.msk [vmem:[#allocation2] sm:$0x3] %vm482, %v481
    %vm484 = vcmask 238720
    %v485 = vsel %vm484, %v476, -inf
    %486 = vmax.xlane.f32.xlu0 %v485
    %v487 = vpop.xlane.xlu0 %486
    %vm488 = vcmask 9224
    %489 = vst.msk [vmem:[#allocation2] sm:$0x3] %vm488, %v487
    %vm490 = vcmask 369920
    %v491 = vsel %vm490, %v476, -inf
    %492 = vmax.xlane.f32.xlu0 %v491
    %v493 = vpop.xlane.xlu0 %492
    %vm494 = vcmask 17424
    %495 = vst.msk [vmem:[#allocation2] sm:$0x3] %vm494, %v493
    %vm496 = vcmask 501120
    %v497 = vsel %vm496, %v476, -inf
    %498 = vmax.xlane.f32.xlu0 %v497
    %v499 = vpop.xlane.xlu0 %498
    %vm500 = vcmask 25624
    %501 = vst.msk [vmem:[#allocation2] sm:$0x3] %vm500, %v499
    %vm502 = vcmask 632320
    %v503 = vsel %vm502, %v476, -inf
    %504 = vmax.xlane.f32.xlu0 %v503
    %v505 = vpop.xlane.xlu0 %504
    %vm506 = vcmask 33824
    %507 = vst.msk [vmem:[#allocation2] sm:$0x3] %vm506, %v505
    %vm508 = vcmask 763520
    %v509 = vsel %vm508, %v476, -inf
    %510 = vmax.xlane.f32.xlu0 %v509
    %v511 = vpop.xlane.xlu0 %510
    %vm512 = vcmask 42024
    %513 = vst.msk [vmem:[#allocation2] sm:$0x3] %vm512, %v511
    %vm514 = vcmask 894720
    %v515 = vsel %vm514, %v476, -inf
    %516 = vmax.xlane.f32.xlu0 %v515
    %v517 = vpop.xlane.xlu0 %516
    %vm518 = vcmask 50224
    %519 = vst.msk [vmem:[#allocation2] sm:$0x3] %vm518, %v517
    %vm520 = vcmask 1025920
    %v521 = vsel %vm520, %v476, -inf
    %522 = vmax.xlane.f32.xlu0 %v521
    %v523 = vpop.xlane.xlu0 %522
    %vm524 = vcmask 58424
    %525 = vst.msk [vmem:[#allocation2] sm:$0x3] %vm524, %v523
    %v526 = vld [vmem:[#allocation8] sm:$0x1]
    %v527 = vlaneseq
    %v528 = vshrl.u32 %v527, 7
    %v529 = vsub.s32 0, %v528
    %v530 = vrot.slane %v526, %v529
    %v531 = vmul.f32 %v202, %v530
    %v532 = vmul.f32 %v203, %v530
    %v533 = vmul.f32 %v204, %v530
    %v534 = vmul.f32 %v205, %v530
    %v535 = vld [vmem:[#allocation8 + $0x5] sm:$0x1]
    %v536 = vlaneseq
    %v537 = vshrl.u32 %v536, 7
    %v538 = vsub.s32 0, %v537
    %v539 = vrot.slane %v535, %v538
    %v540 = vmul.f32 %v202, %v539
    %v541 = vmul.f32 %v203, %v539
    %v542 = vmul.f32 %v204, %v539
    %v543 = vmul.f32 %v205, %v539
    %v548 = vrot.slane %v540, 1
    %v549 = vrot.slane %v541, 1
    %v550 = vsel %vm280, %v548, %v549
    %v551 = vrot.slane %v542, 1
    %v552 = vrot.slane %v543, 1
    %v553 = vsel %vm280, %v551, %v552
    %v558 = vadd.f32 %v531, %v550
    %v559 = vadd.f32 %v532, %v549
    %v560 = vadd.f32 %v533, %v553
    %v561 = vadd.f32 %v534, %v552
    %v562 = vld [vmem:[#allocation8 + $0xa] sm:$0x1]
    %v563 = vlaneseq
    %v564 = vshrl.u32 %v563, 7
    %v565 = vsub.s32 0, %v564
    %v566 = vrot.slane %v562, %v565
    %v567 = vmul.f32 %v202, %v566
    %v568 = vmul.f32 %v203, %v566
    %v569 = vmul.f32 %v204, %v566
    %v570 = vmul.f32 %v205, %v566
    %v575 = vrot.slane %v567, 2
    %v576 = vrot.slane %v568, 2
    %v577 = vsel %vm308, %v575, %v576
    %v578 = vrot.slane %v569, 2
    %v579 = vrot.slane %v570, 2
    %v580 = vsel %vm308, %v578, %v579
    %v585 = vadd.f32 %v558, %v577
    %v586 = vadd.f32 %v559, %v576
    %v587 = vadd.f32 %v560, %v580
    %v588 = vadd.f32 %v561, %v579
    %v589 = vld [vmem:[#allocation8 + $0xf] sm:$0x1]
    %v590 = vlaneseq
    %v591 = vshrl.u32 %v590, 7
    %v592 = vsub.s32 0, %v591
    %v593 = vrot.slane %v589, %v592
    %v594 = vmul.f32 %v202, %v593
    %v595 = vmul.f32 %v203, %v593
    %v596 = vmul.f32 %v204, %v593
    %v597 = vmul.f32 %v205, %v593
    %vm602 = vcmask 1044480
    %v603 = vrot.slane %v594, 3
    %v604 = vrot.slane %v595, 3
    %v605 = vsel %vm602, %v603, %v604
    %v606 = vrot.slane %v596, 3
    %v607 = vrot.slane %v597, 3
    %v608 = vsel %vm602, %v606, %v607
    %v613 = vadd.f32 %v585, %v605
    %v614 = vadd.f32 %v586, %v604
    %v615 = vadd.f32 %v587, %v608
    %v616 = vadd.f32 %v588, %v607
    %v617 = vld [vmem:[#allocation8 + $0x14] sm:$0x1]
    %v618 = vlaneseq
    %v619 = vshrl.u32 %v618, 7
    %v620 = vsub.s32 0, %v619
    %v621 = vrot.slane %v617, %v620
    %v622 = vmul.f32 %v202, %v621
    %v623 = vmul.f32 %v203, %v621
    %v624 = vmul.f32 %v204, %v621
    %v625 = vmul.f32 %v205, %v621
    %vm630 = vcmask 1043456
    %v631 = vrot.slane %v622, 4
    %v632 = vrot.slane %v623, 4
    %v633 = vsel %vm630, %v631, %v632
    %v634 = vrot.slane %v624, 4
    %v635 = vrot.slane %v625, 4
    %v636 = vsel %vm630, %v634, %v635
    %v641 = vadd.f32 %v613, %v633
    %v642 = vadd.f32 %v614, %v632
    %v643 = vadd.f32 %v615, %v636
    %v644 = vadd.f32 %v616, %v635
    %v645 = vld [vmem:[#allocation8 + $0x1] sm:$0x1]
    %v646 = vlaneseq
    %v647 = vshrl.u32 %v646, 7
    %v648 = vsub.s32 0, %v647
    %v649 = vrot.slane %v645, %v648
    %v650 = vmul.f32 %v211, %v649
    %v651 = vmul.f32 %v213, %v649
    %v652 = vmul.f32 %v215, %v649
    %v653 = vmul.f32 %v217, %v649
    %v654 = vadd.f32 %v641, %v650
    %v655 = vadd.f32 %v642, %v651
    %v656 = vadd.f32 %v643, %v652
    %v657 = vadd.f32 %v644, %v653
    %v658 = vld [vmem:[#allocation8 + $0x6] sm:$0x1]
    %v659 = vlaneseq
    %v660 = vshrl.u32 %v659, 7
    %v661 = vsub.s32 0, %v660
    %v662 = vrot.slane %v658, %v661
    %v663 = vmul.f32 %v211, %v662
    %v664 = vmul.f32 %v213, %v662
    %v665 = vmul.f32 %v215, %v662
    %v666 = vmul.f32 %v217, %v662
    %v671 = vrot.slane %v663, 1
    %v672 = vrot.slane %v664, 1
    %v673 = vsel %vm280, %v671, %v672
    %v674 = vrot.slane %v665, 1
    %v675 = vrot.slane %v666, 1
    %v676 = vsel %vm280, %v674, %v675
    %v681 = vadd.f32 %v654, %v673
    %v682 = vadd.f32 %v655, %v672
    %v683 = vadd.f32 %v656, %v676
    %v684 = vadd.f32 %v657, %v675
    %v685 = vld [vmem:[#allocation8 + $0xb] sm:$0x1]
    %v686 = vlaneseq
    %v687 = vshrl.u32 %v686, 7
    %v688 = vsub.s32 0, %v687
    %v689 = vrot.slane %v685, %v688
    %v690 = vmul.f32 %v211, %v689
    %v691 = vmul.f32 %v213, %v689
    %v692 = vmul.f32 %v215, %v689
    %v693 = vmul.f32 %v217, %v689
    %v698 = vrot.slane %v690, 2
    %v699 = vrot.slane %v691, 2
    %v700 = vsel %vm308, %v698, %v699
    %v701 = vrot.slane %v692, 2
    %v702 = vrot.slane %v693, 2
    %v703 = vsel %vm308, %v701, %v702
    %v708 = vadd.f32 %v681, %v700
    %v709 = vadd.f32 %v682, %v699
    %v710 = vadd.f32 %v683, %v703
    %v711 = vadd.f32 %v684, %v702
    %v712 = vld [vmem:[#allocation8 + $0x10] sm:$0x1]
    %v713 = vlaneseq
    %v714 = vshrl.u32 %v713, 7
    %v715 = vsub.s32 0, %v714
    %v716 = vrot.slane %v712, %v715
    %v717 = vmul.f32 %v211, %v716
    %v718 = vmul.f32 %v213, %v716
    %v719 = vmul.f32 %v215, %v716
    %v720 = vmul.f32 %v217, %v716
    %v725 = vrot.slane %v717, 3
    %v726 = vrot.slane %v718, 3
    %v727 = vsel %vm602, %v725, %v726
    %v728 = vrot.slane %v719, 3
    %v729 = vrot.slane %v720, 3
    %v730 = vsel %vm602, %v728, %v729
    %v735 = vadd.f32 %v708, %v727
    %v736 = vadd.f32 %v709, %v726
    %v737 = vadd.f32 %v710, %v730
    %v738 = vadd.f32 %v711, %v729
    %v739 = vld [vmem:[#allocation8 + $0x15] sm:$0x1]
    %v740 = vlaneseq
    %v741 = vshrl.u32 %v740, 7
    %v742 = vsub.s32 0, %v741
    %v743 = vrot.slane %v739, %v742
    %v744 = vmul.f32 %v211, %v743
    %v745 = vmul.f32 %v213, %v743
    %v746 = vmul.f32 %v215, %v743
    %v747 = vmul.f32 %v217, %v743
    %v752 = vrot.slane %v744, 4
    %v753 = vrot.slane %v745, 4
    %v754 = vsel %vm630, %v752, %v753
    %v755 = vrot.slane %v746, 4
    %v756 = vrot.slane %v747, 4
    %v757 = vsel %vm630, %v755, %v756
    %v762 = vadd.f32 %v735, %v754
    %v763 = vadd.f32 %v736, %v753
    %v764 = vadd.f32 %v737, %v757
    %v765 = vadd.f32 %v738, %v756
    %v766 = vld [vmem:[#allocation8 + $0x2] sm:$0x1]
    %v767 = vlaneseq
    %v768 = vshrl.u32 %v767, 7
    %v769 = vsub.s32 0, %v768
    %v770 = vrot.slane %v766, %v769
    %v771 = vmul.f32 %v223, %v770
    %v772 = vmul.f32 %v225, %v770
    %v773 = vmul.f32 %v227, %v770
    %v774 = vmul.f32 %v229, %v770
    %v775 = vadd.f32 %v762, %v771
    %v776 = vadd.f32 %v763, %v772
    %v777 = vadd.f32 %v764, %v773
    %v778 = vadd.f32 %v765, %v774
    %v779 = vld [vmem:[#allocation8 + $0x7] sm:$0x1]
    %v780 = vlaneseq
    %v781 = vshrl.u32 %v780, 7
    %v782 = vsub.s32 0, %v781
    %v783 = vrot.slane %v779, %v782
    %v784 = vmul.f32 %v223, %v783
    %v785 = vmul.f32 %v225, %v783
    %v786 = vmul.f32 %v227, %v783
    %v787 = vmul.f32 %v229, %v783
    %v792 = vrot.slane %v784, 1
    %v793 = vrot.slane %v785, 1
    %v794 = vsel %vm280, %v792, %v793
    %v795 = vrot.slane %v786, 1
    %v796 = vrot.slane %v787, 1
    %v797 = vsel %vm280, %v795, %v796
    %v802 = vadd.f32 %v775, %v794
    %v803 = vadd.f32 %v776, %v793
    %v804 = vadd.f32 %v777, %v797
    %v805 = vadd.f32 %v778, %v796
    %v806 = vld [vmem:[#allocation8 + $0xc] sm:$0x1]
    %v807 = vlaneseq
    %v808 = vshrl.u32 %v807, 7
    %v809 = vsub.s32 0, %v808
    %v810 = vrot.slane %v806, %v809
    %v811 = vmul.f32 %v223, %v810
    %v812 = vmul.f32 %v225, %v810
    %v813 = vmul.f32 %v227, %v810
    %v814 = vmul.f32 %v229, %v810
    %v819 = vrot.slane %v811, 2
    %v820 = vrot.slane %v812, 2
    %v821 = vsel %vm308, %v819, %v820
    %v822 = vrot.slane %v813, 2
    %v823 = vrot.slane %v814, 2
    %v824 = vsel %vm308, %v822, %v823
    %v829 = vadd.f32 %v802, %v821
    %v830 = vadd.f32 %v803, %v820
    %v831 = vadd.f32 %v804, %v824
    %v832 = vadd.f32 %v805, %v823
    %v833 = vld [vmem:[#allocation8 + $0x11] sm:$0x1]
    %v834 = vlaneseq
    %v835 = vshrl.u32 %v834, 7
    %v836 = vsub.s32 0, %v835
    %v837 = vrot.slane %v833, %v836
    %v838 = vmul.f32 %v223, %v837
    %v839 = vmul.f32 %v225, %v837
    %v840 = vmul.f32 %v227, %v837
    %v841 = vmul.f32 %v229, %v837
    %v846 = vrot.slane %v838, 3
    %v847 = vrot.slane %v839, 3
    %v848 = vsel %vm602, %v846, %v847
    %v849 = vrot.slane %v840, 3
    %v850 = vrot.slane %v841, 3
    %v851 = vsel %vm602, %v849, %v850
    %v856 = vadd.f32 %v829, %v848
    %v857 = vadd.f32 %v830, %v847
    %v858 = vadd.f32 %v831, %v851
    %v859 = vadd.f32 %v832, %v850
    %v860 = vld [vmem:[#allocation8 + $0x16] sm:$0x1]
    %v861 = vlaneseq
    %v862 = vshrl.u32 %v861, 7
    %v863 = vsub.s32 0, %v862
    %v864 = vrot.slane %v860, %v863
    %v865 = vmul.f32 %v223, %v864
    %v866 = vmul.f32 %v225, %v864
    %v867 = vmul.f32 %v227, %v864
    %v868 = vmul.f32 %v229, %v864
    %v873 = vrot.slane %v865, 4
    %v874 = vrot.slane %v866, 4
    %v875 = vsel %vm630, %v873, %v874
    %v876 = vrot.slane %v867, 4
    %v877 = vrot.slane %v868, 4
    %v878 = vsel %vm630, %v876, %v877
    %v883 = vadd.f32 %v856, %v875
    %v884 = vadd.f32 %v857, %v874
    %v885 = vadd.f32 %v858, %v878
    %v886 = vadd.f32 %v859, %v877
    %v887 = vld [vmem:[#allocation8 + $0x3] sm:$0x1]
    %v888 = vlaneseq
    %v889 = vshrl.u32 %v888, 7
    %v890 = vsub.s32 0, %v889
    %v891 = vrot.slane %v887, %v890
    %v892 = vmul.f32 %v235, %v891
    %v893 = vmul.f32 %v237, %v891
    %v894 = vmul.f32 %v239, %v891
    %v895 = vmul.f32 %v241, %v891
    %v896 = vadd.f32 %v883, %v892
    %v897 = vadd.f32 %v884, %v893
    %v898 = vadd.f32 %v885, %v894
    %v899 = vadd.f32 %v886, %v895
    %v900 = vld [vmem:[#allocation8 + $0x8] sm:$0x1]
    %v901 = vlaneseq
    %v902 = vshrl.u32 %v901, 7
    %v903 = vsub.s32 0, %v902
    %v904 = vrot.slane %v900, %v903
    %v905 = vmul.f32 %v235, %v904
    %v906 = vmul.f32 %v237, %v904
    %v907 = vmul.f32 %v239, %v904
    %v908 = vmul.f32 %v241, %v904
    %v913 = vrot.slane %v905, 1
    %v914 = vrot.slane %v906, 1
    %v915 = vsel %vm280, %v913, %v914
    %v916 = vrot.slane %v907, 1
    %v917 = vrot.slane %v908, 1
    %v918 = vsel %vm280, %v916, %v917
    %v923 = vadd.f32 %v896, %v915
    %v924 = vadd.f32 %v897, %v914
    %v925 = vadd.f32 %v898, %v918
    %v926 = vadd.f32 %v899, %v917
    %v927 = vld [vmem:[#allocation8 + $0xd] sm:$0x1]
    %v928 = vlaneseq
    %v929 = vshrl.u32 %v928, 7
    %v930 = vsub.s32 0, %v929
    %v931 = vrot.slane %v927, %v930
    %v932 = vmul.f32 %v235, %v931
    %v933 = vmul.f32 %v237, %v931
    %v934 = vmul.f32 %v239, %v931
    %v935 = vmul.f32 %v241, %v931
    %v940 = vrot.slane %v932, 2
    %v941 = vrot.slane %v933, 2
    %v942 = vsel %vm308, %v940, %v941
    %v943 = vrot.slane %v934, 2
    %v944 = vrot.slane %v935, 2
    %v945 = vsel %vm308, %v943, %v944
    %v950 = vadd.f32 %v923, %v942
    %v951 = vadd.f32 %v924, %v941
    %v952 = vadd.f32 %v925, %v945
    %v953 = vadd.f32 %v926, %v944
    %v954 = vld [vmem:[#allocation8 + $0x12] sm:$0x1]
    %v955 = vlaneseq
    %v956 = vshrl.u32 %v955, 7
    %v957 = vsub.s32 0, %v956
    %v958 = vrot.slane %v954, %v957
    %v959 = vmul.f32 %v235, %v958
    %v960 = vmul.f32 %v237, %v958
    %v961 = vmul.f32 %v239, %v958
    %v962 = vmul.f32 %v241, %v958
    %v967 = vrot.slane %v959, 3
    %v968 = vrot.slane %v960, 3
    %v969 = vsel %vm602, %v967, %v968
    %v970 = vrot.slane %v961, 3
    %v971 = vrot.slane %v962, 3
    %v972 = vsel %vm602, %v970, %v971
    %v977 = vadd.f32 %v950, %v969
    %v978 = vadd.f32 %v951, %v968
    %v979 = vadd.f32 %v952, %v972
    %v980 = vadd.f32 %v953, %v971
    %v981 = vld [vmem:[#allocation8 + $0x17] sm:$0x1]
    %v982 = vlaneseq
    %v983 = vshrl.u32 %v982, 7
    %v984 = vsub.s32 0, %v983
    %v985 = vrot.slane %v981, %v984
    %v986 = vmul.f32 %v235, %v985
    %v987 = vmul.f32 %v237, %v985
    %v988 = vmul.f32 %v239, %v985
    %v989 = vmul.f32 %v241, %v985
    %v994 = vrot.slane %v986, 4
    %v995 = vrot.slane %v987, 4
    %v996 = vsel %vm630, %v994, %v995
    %v997 = vrot.slane %v988, 4
    %v998 = vrot.slane %v989, 4
    %v999 = vsel %vm630, %v997, %v998
    %v1004 = vadd.f32 %v977, %v996
    %v1005 = vadd.f32 %v978, %v995
    %v1006 = vadd.f32 %v979, %v999
    %v1007 = vadd.f32 %v980, %v998
    %v1008 = vld [vmem:[#allocation8 + $0x4] sm:$0x1]
    %v1009 = vlaneseq
    %v1010 = vshrl.u32 %v1009, 7
    %v1011 = vsub.s32 0, %v1010
    %v1012 = vrot.slane %v1008, %v1011
    %v1013 = vmul.f32 %v247, %v1012
    %v1014 = vmul.f32 %v249, %v1012
    %v1015 = vmul.f32 %v251, %v1012
    %v1016 = vmul.f32 %v253, %v1012
    %v1017 = vadd.f32 %v1004, %v1013
    %v1018 = vadd.f32 %v1005, %v1014
    %v1019 = vadd.f32 %v1006, %v1015
    %v1020 = vadd.f32 %v1007, %v1016
    %v1021 = vld [vmem:[#allocation8 + $0x9] sm:$0x1]
    %v1022 = vlaneseq
    %v1023 = vshrl.u32 %v1022, 7
    %v1024 = vsub.s32 0, %v1023
    %v1025 = vrot.slane %v1021, %v1024
    %v1026 = vmul.f32 %v247, %v1025
    %v1027 = vmul.f32 %v249, %v1025
    %v1028 = vmul.f32 %v251, %v1025
    %v1029 = vmul.f32 %v253, %v1025
    %v1034 = vrot.slane %v1026, 1
    %v1035 = vrot.slane %v1027, 1
    %v1036 = vsel %vm280, %v1034, %v1035
    %v1037 = vrot.slane %v1028, 1
    %v1038 = vrot.slane %v1029, 1
    %v1039 = vsel %vm280, %v1037, %v1038
    %v1044 = vadd.f32 %v1017, %v1036
    %v1045 = vadd.f32 %v1018, %v1035
    %v1046 = vadd.f32 %v1019, %v1039
    %v1047 = vadd.f32 %v1020, %v1038
    %v1048 = vld [vmem:[#allocation8 + $0xe] sm:$0x1]
    %v1049 = vlaneseq
    %v1050 = vshrl.u32 %v1049, 7
    %v1051 = vsub.s32 0, %v1050
    %v1052 = vrot.slane %v1048, %v1051
    %v1053 = vmul.f32 %v247, %v1052
    %v1054 = vmul.f32 %v249, %v1052
    %v1055 = vmul.f32 %v251, %v1052
    %v1056 = vmul.f32 %v253, %v1052
    %v1061 = vrot.slane %v1053, 2
    %v1062 = vrot.slane %v1054, 2
    %v1063 = vsel %vm308, %v1061, %v1062
    %v1064 = vrot.slane %v1055, 2
    %v1065 = vrot.slane %v1056, 2
    %v1066 = vsel %vm308, %v1064, %v1065
    %v1071 = vadd.f32 %v1044, %v1063
    %v1072 = vadd.f32 %v1045, %v1062
    %v1073 = vadd.f32 %v1046, %v1066
    %v1074 = vadd.f32 %v1047, %v1065
    %v1075 = vld [vmem:[#allocation8 + $0x13] sm:$0x1]
    %v1076 = vlaneseq
    %v1077 = vshrl.u32 %v1076, 7
    %v1078 = vsub.s32 0, %v1077
    %v1079 = vrot.slane %v1075, %v1078
    %v1080 = vmul.f32 %v247, %v1079
    %v1081 = vmul.f32 %v249, %v1079
    %v1082 = vmul.f32 %v251, %v1079
    %v1083 = vmul.f32 %v253, %v1079
    %v1088 = vrot.slane %v1080, 3
    %v1089 = vrot.slane %v1081, 3
    %v1090 = vsel %vm602, %v1088, %v1089
    %v1091 = vrot.slane %v1082, 3
    %v1092 = vrot.slane %v1083, 3
    %v1093 = vsel %vm602, %v1091, %v1092
    %v1098 = vadd.f32 %v1071, %v1090
    %v1099 = vadd.f32 %v1072, %v1089
    %v1100 = vadd.f32 %v1073, %v1093
    %v1101 = vadd.f32 %v1074, %v1092
    %v1102 = vld [vmem:[#allocation8 + $0x18] sm:$0x1]
    %v1103 = vlaneseq
    %v1104 = vshrl.u32 %v1103, 7
    %v1105 = vsub.s32 0, %v1104
    %v1106 = vrot.slane %v1102, %v1105
    %v1107 = vmul.f32 %v247, %v1106
    %v1108 = vmul.f32 %v249, %v1106
    %v1109 = vmul.f32 %v251, %v1106
    %v1110 = vmul.f32 %v253, %v1106
    %v1115 = vrot.slane %v1107, 4
    %v1116 = vrot.slane %v1108, 4
    %v1117 = vsel %vm630, %v1115, %v1116
    %v1118 = vrot.slane %v1109, 4
    %v1119 = vrot.slane %v1110, 4
    %v1120 = vsel %vm630, %v1118, %v1119
    %v1125 = vadd.f32 %v1098, %v1117
    %v1126 = vadd.f32 %v1099, %v1116
    %v1127 = vadd.f32 %v1100, %v1120
    %v1128 = vadd.f32 %v1101, %v1119
    %v1129 = vsel %vm630, %v1126, -inf
    %v1130 = vmax.f32 %v1125, %v1129
    %v1131 = vrot.slane %v1130, 4
    %v1132 = vmax.f32 %v1130, %v1131
    %v1133 = vrot.slane %v1132, 2
    %v1134 = vmax.f32 %v1132, %v1133
    %v1135 = vrot.slane %v1134, 1
    %v1136 = vmax.f32 %v1134, %v1135
    %v1137 = vsel %vm630, %v1128, -inf
    %v1138 = vmax.f32 %v1127, %v1137
    %v1139 = vrot.slane %v1138, 4
    %v1140 = vmax.f32 %v1138, %v1139
    %v1141 = vrot.slane %v1140, 2
    %v1142 = vmax.f32 %v1140, %v1141
    %v1143 = vrot.slane %v1142, 1
    %v1144 = vmax.f32 %v1142, %v1143
    %v1147 = vsel %vm475, %v1144, %v1136
    %vm1149 = vcmask 91136
    %v1150 = vsel %vm1149, %v1147, -inf
    %1151 = vmax.xlane.f32.xlu0 %v1150
    %v1152 = vpop.xlane.xlu0 %1151
    %vm1153 = vcmask 66624
    %1154 = vst.msk [vmem:[#allocation2] sm:$0x3] %vm1153, %v1152
    %vm1155 = vcmask 222336
    %v1156 = vsel %vm1155, %v1147, -inf
    %1157 = vmax.xlane.f32.xlu0 %v1156
    %v1158 = vpop.xlane.xlu0 %1157
    %vm1159 = vcmask 74824
    %1160 = vst.msk [vmem:[#allocation2] sm:$0x3] %vm1159, %v1158
    %vm1161 = vcmask 353536
    %v1162 = vsel %vm1161, %v1147, -inf
    %1163 = vmax.xlane.f32.xlu0 %v1162
    %v1164 = vpop.xlane.xlu0 %1163
    %vm1165 = vcmask 83024
    %1166 = vst.msk [vmem:[#allocation2] sm:$0x3] %vm1165, %v1164
    %vm1167 = vcmask 484736
    %v1168 = vsel %vm1167, %v1147, -inf
    %1169 = vmax.xlane.f32.xlu0 %v1168
    %v1170 = vpop.xlane.xlu0 %1169
    %vm1171 = vcmask 91224
    %1172 = vst.msk [vmem:[#allocation2] sm:$0x3] %vm1171, %v1170
    %vm1173 = vcmask 615936
    %v1174 = vsel %vm1173, %v1147, -inf
    %1175 = vmax.xlane.f32.xlu0 %v1174
    %v1176 = vpop.xlane.xlu0 %1175
    %vm1177 = vcmask 99424
    %1178 = vst.msk [vmem:[#allocation2] sm:$0x3] %vm1177, %v1176
    %vm1179 = vcmask 747136
    %v1180 = vsel %vm1179, %v1147, -inf
    %1181 = vmax.xlane.f32.xlu0 %v1180
    %v1182 = vpop.xlane.xlu0 %1181
    %vm1183 = vcmask 107624
    %1184 = vst.msk [vmem:[#allocation2] sm:$0x3] %vm1183, %v1182
    %vm1185 = vcmask 878336
    %v1186 = vsel %vm1185, %v1147, -inf
    %1187 = vmax.xlane.f32.xlu0 %v1186
    %v1188 = vpop.xlane.xlu0 %1187
    %vm1189 = vcmask 115824
    %1190 = vst.msk [vmem:[#allocation2] sm:$0x3] %vm1189, %v1188
    %vm1191 = vcmask 1009536
    %v1192 = vsel %vm1191, %v1147, -inf
    %1193 = vmax.xlane.f32.xlu0 %v1192
    %v1194 = vpop.xlane.xlu0 %1193
    %vm1195 = vcmask 124024
    %1196 = vst.msk [vmem:[#allocation2] sm:$0x3] %vm1195, %v1194
    %v1197 = vld [vmem:[#allocation2] sm:$0x3]
    %v1198 = vld [vmem:[%s3] sm:$0x1]
    %v1200 = vlaneseq
    %v1201 = vshrl.u32 %v1200, 7
    %v1202 = vsub.s32 0, %v1201
    %v1203 = vrot.slane %v1198, %v1202
    %v1205 = vadd.f32 %v1197, %v1203
    %v1206 = vmax.f32 %v1205, 0.0
    %v1207 = vld [vmem:[#allocation9] sm:$0xff]
    %v1208 = vld [vmem:[#allocation9 + $0x8] sm:$0xff]
    %v1209 = vld [vmem:[%s5] sm:$0x1]
    %v1211 = vlaneseq
    %v1212 = vshrl.u32 %v1211, 7
    %v1213 = vsub.s32 0, %v1212
    %v1214 = vrot.slane %v1209, %v1213
    %v1217 = vsel %vm171, %v1206, 0
    %1219 = vmatprep.subr.mxu0 0.0
    %1220 = vmatpush1.msra.mxu0 0.0
    %1221 = vmatprep.subr.mxu0 0.0
    %1222 = vmatpush1.msra.mxu0 0.0
    %1223 = vmatprep.subr.mxu0 0.0
    %1224 = vmatpush1.msra.mxu0 0.0
    %1225 = vmatprep.subr.mxu0 0.0
    %1226 = vmatpush1.msra.mxu0 0.0
    %1227 = vmatprep.subr.mxu0 0.0
    %1228 = vmatpush1.msra.mxu0 0.0
    %1229 = vmatprep.subr.mxu0 0.0
    %1230 = vmatpush1.msra.mxu0 0.0
    %1231 = vmatprep.subr.mxu0 0.0
    %1232 = vmatpush1.msra.mxu0 0.0
    %1233 = vmatprep.subr.mxu0 0.0
    %1234 = vmatpush1.msra.mxu0 0.0
    %1235 = vmatprep.subr.mxu0 0.0
    %1236 = vmatpush1.msra.mxu0 0.0
    %1237 = vmatprep.subr.mxu0 0.0
    %1238 = vmatpush1.msra.mxu0 0.0
    %1239 = vmatprep.subr.mxu0 0.0
    %1240 = vmatpush1.msra.mxu0 0.0
    %1241 = vmatprep.subr.mxu0 0.0
    %1242 = vmatpush1.msra.mxu0 0.0
    %1243 = vmatprep.subr.mxu0 0.0
    %1244 = vmatpush1.msra.mxu0 0.0
    %1245 = vmatprep.subr.mxu0 0.0
    %1246 = vmatpush1.msra.mxu0 0.0
    %1247 = vmatprep.subr.mxu0 0.0
    %1248 = vmatpush1.msra.mxu0 %v1208
    %1249 = vmatprep.subr.mxu0 0.0
    %1250 = vmatpush1.msra.mxu0 %v1207
    %1251 = vmatprep.subr.mxu0 0.0
    %1252 = vmatpush2.msra.mxu0 0.0
    %1253 = vmatprep.subr.mxu0 0.0
    %1254 = vmatpush2.msra.mxu0 0.0
    %1255 = vmatprep.subr.mxu0 0.0
    %1256 = vmatpush2.msra.mxu0 0.0
    %1257 = vmatprep.subr.mxu0 0.0
    %1258 = vmatpush2.msra.mxu0 0.0
    %1259 = vmatprep.subr.mxu0 0.0
    %1260 = vmatpush2.msra.mxu0 0.0
    %1261 = vmatprep.subr.mxu0 0.0
    %1262 = vmatpush2.msra.mxu0 0.0
    %1263 = vmatprep.subr.mxu0 0.0
    %1264 = vmatpush2.msra.mxu0 0.0
    %1265 = vmatprep.subr.mxu0 0.0
    %1266 = vmatpush2.msra.mxu0 0.0
    %1267 = vmatprep.subr.mxu0 0.0
    %1268 = vmatpush2.msra.mxu0 0.0
    %1269 = vmatprep.subr.mxu0 0.0
    %1270 = vmatpush2.msra.mxu0 0.0
    %1271 = vmatprep.subr.mxu0 0.0
    %1272 = vmatpush2.msra.mxu0 0.0
    %1273 = vmatprep.subr.mxu0 0.0
    %1274 = vmatpush2.msra.mxu0 0.0
    %1275 = vmatprep.subr.mxu0 0.0
    %1276 = vmatpush2.msra.mxu0 0.0
    %1277 = vmatprep.subr.mxu0 0.0
    %1278 = vmatpush2.msra.mxu0 0.0
    %1279 = vmatprep.subr.mxu0 0.0
    %1280 = vmatpush2.msra.mxu0 0.0
    %1281 = vmatprep.subr.mxu0 0.0
    %1282 = vmatpush2.msra.mxu0 0.0
    %1283 = vmatprep.mubr.f32.mxu0 0.0
    %1284 = vmatmul.mubr.f32.gmra.mxu0 %v1217
    %v1285 = vpop.f32.mrf.mxu0
    %v1286 = vadd.f32 %v1214, %v1285
    %v1287 = vpop.f32.mrf.mxu0
    %1288 = vdwg.mxu0
    %vm1289 = vcmask 254976
    %1290 = vst.msk [vmem:[#allocation11] sm:$0x3] %vm1289, %v1286
    // Predicated region
    $region42: #{tpu_custom_call.1} parent=1 // pred_check
      _
    $region43: #{tpu_custom_call.1} parent=1 // pred_check_branch
      %1292 = sbr.rel (0) target = $region45
    $region44: #{tpu_custom_call.1} parent=1 // pred_region
      %s1294 = ssub.s32 32, 32
      %1295 = vsyncadd [#allocation5], %s1294
      %s1297 = sshll.u32 [#allocation11], 4
      %s1298 = int_to_ptr.vmem [resolvable:$true] %s1297
      %1300 = dma.vmem_to_hbm [thread:$0]  %s1298, 32, %s6, [#allocation5]
    $region45: #{tpu_custom_call.1} parent=1 // pred_fallthru
      _
    // Predicated region
    $region46: #{tpu_custom_call.1} parent=1 // pred_check
      _
    $region47: #{tpu_custom_call.1} parent=1 // pred_check_branch
      %1302 = sbr.rel (0) target = $region49
    $region48: #{tpu_custom_call.1} parent=1 // pred_region
      %1303 = dma.done [#allocation5], 32
    $region49: #{tpu_custom_call.1} parent=1 // pred_fallthru
      _
    %1304 = vsyncpa [#allocation4], 1
    %1305 = vsyncpa [#allocation7], 1
    %1306 = vsyncpa [#allocation10], 1
    %1307 = vsyncpa [#allocation5], 1

</llo_original>
